<compile_context>
chip_gen: v6e
topology: v6e:2x2x1
jax: 0.10.0
libtpu: 0.0.40
codegen_flags: <defaults>
</compile_context>

<pallas_src>
import functools

import jax
import jax.numpy as jnp
from jax.experimental import pallas as pl
from jax.experimental.pallas import tpu as pltpu

EPS = 1e-5          # nn.LayerNorm default
DINO_DIM = 384      # dinov2_vits14_reg embedding dim


def _round_up(x, m):
    return (x + m - 1) // m * m


def _vmem_capacity_bytes():
    """Physical VMEM per core; conservative v7x fallback if the query fails."""
    try:
        info = pltpu.get_tpu_info()
        cap = getattr(info, "vmem_capacity_bytes", None)
        if cap:
            return int(cap)
    except Exception:
        pass
    return 64 * 1024 * 1024


def _pick_batch_tile(B):
    """Batch tile: multiple of 8 (or == B when tiny), >= 2 grid steps once
    B >= 32 (so v7x's two TensorCores both get work and DMA is pipelined),
    >= 128 rows for large B (v5e MXU occupancy), capped at 256 rows."""
    if B <= 16:
        return B
    target = -(-B // 2) if B >= 32 else B
    tb = _round_up(target, 8)
    if B >= 256:
        tb = max(128, (tb // 128) * 128)
    return min(tb, 256)


def _pick_k_tile(k128, tb, x_itemsize, k_budget_bytes):
    """Largest K tile (multiple of 128, exactly dividing k128) whose
    double-buffered x-tile + stub_w-tile fit within k_budget_bytes."""
    per_k = 2 * tb * x_itemsize + 2 * DINO_DIM * 2   # x (2 buf) + bf16 stub_w (2 buf)
    tk_max = max(128, min(k128, (k_budget_bytes // per_k) // 128 * 128))
    if k128 <= tk_max:
        return k128
    n128 = k128 // 128
    n_min = -(-k128 // tk_max)
    for n in range(n_min, n128 + 1):
        if n128 % n == 0:
            return (n128 // n) * 128
    return 128


def _single_buffered(block_shape, index_map):
    """Constant-index operands are DMA'd once; request a single VMEM buffer."""
    try:
        return pl.BlockSpec(block_shape, index_map, pipeline_mode=pl.Buffered(1))
    except (AttributeError, TypeError):
        return pl.BlockSpec(block_shape, index_map)


def _encoder_kernel(x_ref, sw_ref, w1_ref, w2_ref, p_ref, o_ref, e_ref,
                    *, feature_dim):
    """K-tiled stub-embed(img1/img2) -> fc -> LayerNorm -> tanh, fused."""
    img = pl.program_id(1)
    k = pl.program_id(2)

    # Stub-DINO contraction, K-tiled: accumulate this image's embedding in f32.
    @pl.when(k == 0)
    def _init():
        e_ref[img] = jnp.zeros(e_ref.shape[1:], e_ref.dtype)

    e_ref[img] += jnp.dot(x_ref[...].astype(jnp.bfloat16), sw_ref[...],
                          preferred_element_type=jnp.float32)

    # Epilogue on the last (img, k) step of this batch block.
    @pl.when(jnp.logical_and(img == pl.num_programs(1) - 1,
                             k == pl.num_programs(2) - 1))
    def _epilogue():
        # fc on the concatenated embedding WITHOUT materializing the concat:
        #   concat([e1, e2]) @ W == e1 @ W[:384] + e2 @ W[384:]
        e1 = e_ref[0].astype(jnp.bfloat16)
        e2 = e_ref[1].astype(jnp.bfloat16)
        h_fc = (jnp.dot(e1, w1_ref[...], preferred_element_type=jnp.float32)
                + jnp.dot(e2, w2_ref[...], preferred_element_type=jnp.float32))

        p = p_ref[...]                       # (3, Fpad) f32: bias, gamma, beta
        h_fc = h_fc + p[0:1, :]              # padded lanes stay exactly 0

        # LayerNorm over the TRUE feature_dim. Padded fc_w columns / bias lanes
        # are zero by construction, so padded h_fc lanes are exactly 0 and the
        # E[x^2] - E[x]^2 form needs no lane mask.
        inv_f = 1.0 / float(feature_dim)
        mean = jnp.sum(h_fc, axis=-1, keepdims=True) * inv_f
        var = jnp.sum(h_fc * h_fc, axis=-1, keepdims=True) * inv_f - mean * mean
        var = jnp.maximum(var, 0.0)          # guard fp rounding
        h_norm = (h_fc - mean) * jax.lax.rsqrt(var + EPS)

        out = jnp.tanh(h_norm * p[1:2, :] + p[2:3, :])   # output_logits=False
        o_ref[...] = out.astype(o_ref.dtype)


def dino_encoder_forward(x, stub_w, fc_w1, fc_w2, params, *, feature_dim):
    """x: (B, 2*K128) activations (f32 or bf16; images concatenated along dim1),
    stub_w: (K128, 384) bf16, fc_w1/fc_w2: (384, Fpad) bf16, params: (3, Fpad)
    f32. Returns (B, feature_dim) f32."""
    B = x.shape[0]
    k128 = stub_w.shape[0]
    assert x.shape[1] == 2 * k128
    f_pad = fc_w1.shape[1]

    tb = _pick_batch_tile(B)
    b_pad = _round_up(B, tb)

    # Per-generation VMEM budget (v5e/v6e: 128 MiB, v7x: 64 MiB physical).
    vmem_cap = _vmem_capacity_bytes()
    vmem_budget = vmem_cap * 3 // 4
    x_itemsize = jnp.dtype(x.dtype).itemsize
    fixed = (2 * DINO_DIM * f_pad * 2          # fc_w1 + fc_w2, single-buffered bf16
             + 3 * f_pad * 4                   # packed bias/gamma/beta (f32)
             + 2 * tb * f_pad * 4              # output tile, double-buffered f32
             + 2 * tb * DINO_DIM * 4)          # e1/e2 accumulator scratch
    k_budget = max(vmem_budget - fixed - (6 << 20), 4 << 20)
    tk = _pick_k_tile(k128, tb, x_itemsize, k_budget)
    nk = k128 // tk

    if b_pad != B:
        x = jnp.pad(x, ((0, b_pad - B), (0, 0)))   # zero rows -> finite outputs

    est = fixed + 2 * tb * tk * x_itemsize + 2 * tk * DINO_DIM * 2
    vmem_limit = int(min(vmem_budget, max(est + (8 << 20), 32 << 20)))

    kernel = functools.partial(_encoder_kernel, feature_dim=feature_dim)
    out = pl.pallas_call(
        kernel,
        out_shape=jax.ShapeDtypeStruct((b_pad, f_pad), jnp.float32),
        grid_spec=pltpu.PrefetchScalarGridSpec(
            num_scalar_prefetch=0,
            grid=(b_pad // tb, 2, nk),
            in_specs=[
                # activations: column block = img * nk + k within (B, 2*K128)
                pl.BlockSpec((tb, tk), lambda i, img, k: (i, img * nk + k)),
                # stub weight: per-k block, default double buffer
                pl.BlockSpec((tk, DINO_DIM), lambda i, img, k: (k, 0)),
                # constant-index operands: single buffer (DMA'd once)
                _single_buffered((DINO_DIM, f_pad), lambda i, img, k: (0, 0)),
                _single_buffered((DINO_DIM, f_pad), lambda i, img, k: (0, 0)),
                _single_buffered((3, f_pad), lambda i, img, k: (0, 0)),
            ],
            out_specs=pl.BlockSpec((tb, f_pad), lambda i, img, k: (i, 0)),
            scratch_shapes=[pltpu.VMEM((2, tb, DINO_DIM), jnp.float32)],
        ),
        compiler_params=pltpu.CompilerParams(
            dimension_semantics=("parallel", "arbitrary", "arbitrary"),
            vmem_limit_bytes=vmem_limit,
        ),
    )(x, stub_w, fc_w1, fc_w2, params)
    return out[:B, :feature_dim]


class DINOEncoderPallas:
    """JAX/Pallas port of DINOEncoder.forward (output_logits=False)."""

    def __init__(self, obs_shape, feature_dim, key):
        assert len(obs_shape) == 3
        c, h, w = obs_shape
        assert c == 6, "DINOEncoder splits obs into two 3-channel images"
        self.obs_shape = obs_shape
        self.feature_dim = feature_dim
        self.in_dim = DINO_DIM * (c // 3)            # 768 (fc input dim)
        self.img_dim = 3 * h * w                     # pixels per image
        self.k128 = _round_up(self.img_dim, 128)     # lane-aligned contraction

        k1, k2, k3 = jax.random.split(key, 3)
        # fc: nn.Linear(768, feature_dim) -- f32 master copies.
        bound = 1.0 / jnp.sqrt(jnp.float32(self.in_dim))
        self.fc_w = jax.random.uniform(
            k1, (self.in_dim, feature_dim), jnp.float32, -bound, bound)
        self.fc_b = jax.random.uniform(
            k2, (feature_dim,), jnp.float32, -bound, bound)
        # ln: nn.LayerNorm(feature_dim)
        self.ln_g = jnp.ones((feature_dim,), jnp.float32)
        self.ln_b = jnp.zeros((feature_dim,), jnp.float32)
        # TODO(synk): real dinov2_vits14_reg ViT not translatable to Pallas here.
        self.stub_w = jax.random.normal(
            k3, (self.img_dim, DINO_DIM), jnp.float32) * 0.02

        # Kernel-side copies: bf16 MXU operands, padded lane/sublane friendly.
        # Padded regions are EXACTLY zero -- in-kernel LayerNorm statistics rely
        # on this; re-zero the pad region if these buffers are ever updated.
        f_pad = _round_up(max(feature_dim, 128), 128)
        self.f_pad = f_pad
        sw = jnp.zeros((self.k128, DINO_DIM), jnp.float32)
        sw = sw.at[: self.img_dim].set(self.stub_w)
        self.stub_w_bf16 = sw.astype(jnp.bfloat16)
        fcw = jnp.zeros((self.in_dim, f_pad), jnp.float32)
        fcw = fcw.at[:, :feature_dim].set(self.fc_w)
        self.fc_w1 = fcw[:DINO_DIM].astype(jnp.bfloat16)
        self.fc_w2 = fcw[DINO_DIM:].astype(jnp.bfloat16)
        params = jnp.zeros((3, f_pad), jnp.float32)
        params = params.at[0, :feature_dim].set(self.fc_b)
        params = params.at[1, :feature_dim].set(self.ln_g)
        params = params.at[2, :feature_dim].set(self.ln_b)
        self.params = params

    def forward(self, obs):
        b = obs.shape[0]
        # NCHW (B, 6, H, W) -> (B, 2, 3HW) is a pure reshape (matches
        # torch.split([3, 3], dim=1) + flatten). No wrapper-side bf16 cast: the
        # kernel casts in VMEM, avoiding an extra HBM round trip.
        x = obs.reshape(b, 2, self.img_dim)
        if self.k128 != self.img_dim:
            x = jnp.pad(x, ((0, 0), (0, 0), (0, self.k128 - self.img_dim)))
        x = x.reshape(b, 2 * self.k128)
        return dino_encoder_forward(
            x, self.stub_w_bf16, self.fc_w1, self.fc_w2, self.params,
            feature_dim=self.feature_dim)


def _reference_forward(enc, obs):
    """Pure-JAX reference mirroring the kernel's bf16-operand / f32-accum math."""
    b = obs.shape[0]
    image1, image2 = jnp.split(obs, 2, axis=1)
    x1 = image1.reshape(b, -1).astype(jnp.bfloat16)
    x2 = image2.reshape(b, -1).astype(jnp.bfloat16)
    sw = enc.stub_w.astype(jnp.bfloat16)
    e1 = jnp.dot(x1, sw, preferred_element_type=jnp.float32)
    e2 = jnp.dot(x2, sw, preferred_element_type=jnp.float32)
    w1 = enc.fc_w[:DINO_DIM].astype(jnp.bfloat16)
    w2 = enc.fc_w[DINO_DIM:].astype(jnp.bfloat16)
    h_fc = (jnp.dot(e1.astype(jnp.bfloat16), w1, preferred_element_type=jnp.float32)
            + jnp.dot(e2.astype(jnp.bfloat16), w2, preferred_element_type=jnp.float32)
            + enc.fc_b)
    mean = jnp.mean(h_fc, axis=-1, keepdims=True)
    var = jnp.mean((h_fc - mean) ** 2, axis=-1, keepdims=True)
    h_norm = (h_fc - mean) * jax.lax.rsqrt(var + EPS) * enc.ln_g + enc.ln_b
    return jnp.tanh(h_norm)


if __name__ == "__main__":
    key = jax.random.PRNGKey(0)
    k_param, k_obs = jax.random.split(key)

    B = 2
    obs_shape = (6, 16, 16)   # 2 stacked RGB frames, like the torch module
    feature_dim = 32

    enc = DINOEncoderPallas(obs_shape, feature_dim, k_param)
    obs = jax.random.normal(k_obs, (B,) + obs_shape, jnp.float32)

    out = jax.block_until_ready(enc.forward(obs))
    ref = jax.block_until_ready(_reference_forward(enc, obs))

    assert out.shape == (B, feature_dim)
    assert bool(jnp.all(jnp.isfinite(out)))
    assert jnp.allclose(out, ref, atol=5e-3, rtol=5e-3), "mismatch vs reference"

    print("KERNEL_OK")
</pallas_src>

<mosaic_0001>
module attributes {stable_mosaic.version = 11 : i64} {
  func.func @_encoder_kernel(%arg0: i32, %arg1: i32, %arg2: i32, %arg3: memref<2x768xf32, #tpu.memory_space<vmem>>, %arg4: memref<768x384xbf16, #tpu.memory_space<vmem>>, %arg5: memref<384x128xbf16, #tpu.memory_space<vmem>>, %arg6: memref<384x128xbf16, #tpu.memory_space<vmem>>, %arg7: memref<3x128xf32, #tpu.memory_space<vmem>>, %arg8: memref<2x128xf32, #tpu.memory_space<vmem>>, %arg9: memref<2x2x384xf32, #tpu.memory_space<vmem>>) attributes {dimension_semantics = [#tpu.dimension_semantics<parallel>, #tpu.dimension_semantics<arbitrary>, #tpu.dimension_semantics<arbitrary>], iteration_bounds = array<i64: 1, 2, 1>, scalar_prefetch = 0 : i64, scratch_operands = 1 : i64, tpu.core_type = #tpu.core_type<tc>, window_params = [{transform_indices = @transform_0, window_bounds = array<i64: 2, 768>}, {transform_indices = @transform_1, window_bounds = array<i64: 768, 384>}, {pipeline_mode = #tpu.pipeline_mode<synchronous>, transform_indices = @transform_2, window_bounds = array<i64: 384, 128>}, {pipeline_mode = #tpu.pipeline_mode<synchronous>, transform_indices = @transform_3, window_bounds = array<i64: 384, 128>}, {pipeline_mode = #tpu.pipeline_mode<synchronous>, transform_indices = @transform_4, window_bounds = array<i64: 3, 128>}, {transform_indices = @transform_5, window_bounds = array<i64: 2, 128>}]} {
    %c0_i32 = arith.constant 0 : i32
    %0 = arith.cmpi eq, %arg2, %c0_i32 : i32
    %1 = arith.extui %0 : i1 to i32
    %c0_i32_0 = arith.constant 0 : i32
    %2 = arith.cmpi ne, %1, %c0_i32_0 : i32
    scf.if %2 {
      %cst_10 = arith.constant 0.000000e+00 : f32
      %20 = vector.broadcast %cst_10 : f32 to vector<2x384xf32>
      %21 = arith.index_cast %arg1 : i32 to index
      %c0_11 = arith.constant 0 : index
      %c0_12 = arith.constant 0 : index
      %22 = vector.load %arg9[%21, %c0_11, %c0_12] : memref<2x2x384xf32, #tpu.memory_space<vmem>>, vector<1x2x384xf32>
      %23 = vector.shape_cast %22 : vector<1x2x384xf32> to vector<2x384xf32>
      %24 = vector.shape_cast %20 : vector<2x384xf32> to vector<1x2x384xf32>
      tpu.vector_store %arg9[%21, %c0_11, %c0_12], %24 {strides = array<i32>} : memref<2x2x384xf32, #tpu.memory_space<vmem>>, vector<1x2x384xf32>,
    } else {
    }
    %3 = arith.index_cast %arg1 : i32 to index
    %c0 = arith.constant 0 : index
    %c0_1 = arith.constant 0 : index
    %4 = vector.load %arg9[%3, %c0, %c0_1] : memref<2x2x384xf32, #tpu.memory_space<vmem>>, vector<1x2x384xf32>
    %5 = vector.shape_cast %4 : vector<1x2x384xf32> to vector<2x384xf32>
    %c0_2 = arith.constant 0 : index
    %c0_3 = arith.constant 0 : index
    %6 = vector.load %arg3[%c0_2, %c0_3] : memref<2x768xf32, #tpu.memory_space<vmem>>, vector<2x768xf32>
    %7 = arith.truncf %6 : vector<2x768xf32> to vector<2x768xbf16>
    %c0_4 = arith.constant 0 : index
    %c0_5 = arith.constant 0 : index
    %8 = vector.load %arg4[%c0_4, %c0_5] : memref<768x384xbf16, #tpu.memory_space<vmem>>, vector<768x384xbf16>
    %cst = arith.constant dense<0.000000e+00> : vector<2x384xf32>
    %9 = tpu.matmul %7, %8, %cst {dimension_numbers = #tpu.dot_dimension_numbers<[1], [0], [0], [1], [0, 0, 1, 1], [], []>} : vector<2x768xbf16>, vector<768x384xbf16>, vector<2x384xf32> -> vector<2x384xf32>
    %10 = arith.addf %5, %9 : vector<2x384xf32>
    %11 = arith.index_cast %arg1 : i32 to index
    %c0_6 = arith.constant 0 : index
    %c0_7 = arith.constant 0 : index
    %12 = vector.load %arg9[%11, %c0_6, %c0_7] : memref<2x2x384xf32, #tpu.memory_space<vmem>>, vector<1x2x384xf32>
    %13 = vector.shape_cast %12 : vector<1x2x384xf32> to vector<2x384xf32>
    %14 = vector.shape_cast %10 : vector<2x384xf32> to vector<1x2x384xf32>
    tpu.vector_store %arg9[%11, %c0_6, %c0_7], %14 {strides = array<i32>} : memref<2x2x384xf32, #tpu.memory_space<vmem>>, vector<1x2x384xf32>,
    %c1_i32 = arith.constant 1 : i32
    %15 = arith.cmpi eq, %arg1, %c1_i32 : i32
    %c0_i32_8 = arith.constant 0 : i32
    %16 = arith.cmpi eq, %arg2, %c0_i32_8 : i32
    %17 = arith.andi %15, %16 : i1
    %18 = arith.extui %17 : i1 to i32
    %c0_i32_9 = arith.constant 0 : i32
    %19 = arith.cmpi ne, %18, %c0_i32_9 : i32
    scf.if %19 {
      %c0_10 = arith.constant 0 : index
      %c0_11 = arith.constant 0 : index
      %c0_12 = arith.constant 0 : index
      %20 = vector.load %arg9[%c0_10, %c0_11, %c0_12] : memref<2x2x384xf32, #tpu.memory_space<vmem>>, vector<1x2x384xf32>
      %21 = vector.shape_cast %20 : vector<1x2x384xf32> to vector<2x384xf32>
      %22 = arith.truncf %21 : vector<2x384xf32> to vector<2x384xbf16>
      %c1 = arith.constant 1 : index
      %c0_13 = arith.constant 0 : index
      %c0_14 = arith.constant 0 : index
      %23 = vector.load %arg9[%c1, %c0_13, %c0_14] : memref<2x2x384xf32, #tpu.memory_space<vmem>>, vector<1x2x384xf32>
      %24 = vector.shape_cast %23 : vector<1x2x384xf32> to vector<2x384xf32>
      %25 = arith.truncf %24 : vector<2x384xf32> to vector<2x384xbf16>
      %c0_15 = arith.constant 0 : index
      %c0_16 = arith.constant 0 : index
      %26 = vector.load %arg5[%c0_15, %c0_16] : memref<384x128xbf16, #tpu.memory_space<vmem>>, vector<384x128xbf16>
      %cst_17 = arith.constant dense<0.000000e+00> : vector<2x128xf32>
      %27 = tpu.matmul %22, %26, %cst_17 {dimension_numbers = #tpu.dot_dimension_numbers<[1], [0], [0], [1], [0, 0, 1, 1], [], []>} : vector<2x384xbf16>, vector<384x128xbf16>, vector<2x128xf32> -> vector<2x128xf32>
      %c0_18 = arith.constant 0 : index
      %c0_19 = arith.constant 0 : index
      %28 = vector.load %arg6[%c0_18, %c0_19] : memref<384x128xbf16, #tpu.memory_space<vmem>>, vector<384x128xbf16>
      %cst_20 = arith.constant dense<0.000000e+00> : vector<2x128xf32>
      %29 = tpu.matmul %25, %28, %cst_20 {dimension_numbers = #tpu.dot_dimension_numbers<[1], [0], [0], [1], [0, 0, 1, 1], [], []>} : vector<2x384xbf16>, vector<384x128xbf16>, vector<2x128xf32> -> vector<2x128xf32>
      %30 = arith.addf %27, %29 : vector<2x128xf32>
      %c0_21 = arith.constant 0 : index
      %c0_22 = arith.constant 0 : index
      %31 = vector.load %arg7[%c0_21, %c0_22] : memref<3x128xf32, #tpu.memory_space<vmem>>, vector<3x128xf32>
      %32 = vector.extract_strided_slice %31 {offsets = [0, 0], sizes = [1, 128], strides = [1, 1]} : vector<3x128xf32> to vector<1x128xf32>
      %33 = vector.broadcast %32 : vector<1x128xf32> to vector<2x128xf32>
      %34 = arith.addf %30, %33 : vector<2x128xf32>
      %cst_23 = arith.constant dense<0.000000e+00> : vector<2xf32>
      %35 = vector.multi_reduction <add>, %34, %cst_23 [1] : vector<2x128xf32> to vector<2xf32>
      %36 = vector.shape_cast %35 : vector<2xf32> to vector<2x1xf32>
      %cst_24 = arith.constant 3.125000e-02 : f32
      %37 = vector.broadcast %cst_24 : f32 to vector<2x1xf32>
      %38 = arith.mulf %36, %37 : vector<2x1xf32>
      %39 = arith.mulf %34, %34 : vector<2x128xf32>
      %cst_25 = arith.constant dense<0.000000e+00> : vector<2xf32>
      %40 = vector.multi_reduction <add>, %39, %cst_25 [1] : vector<2x128xf32> to vector<2xf32>
      %41 = vector.shape_cast %40 : vector<2xf32> to vector<2x1xf32>
      %cst_26 = arith.constant 3.125000e-02 : f32
      %42 = vector.broadcast %cst_26 : f32 to vector<2x1xf32>
      %43 = arith.mulf %41, %42 : vector<2x1xf32>
      %44 = arith.mulf %38, %38 : vector<2x1xf32>
      %45 = arith.subf %43, %44 : vector<2x1xf32>
      %cst_27 = arith.constant 0.000000e+00 : f32
      %46 = vector.broadcast %cst_27 : f32 to vector<2x1xf32>
      %47 = arith.maximumf %45, %46 : vector<2x1xf32>
      %48 = vector.broadcast %38 : vector<2x1xf32> to vector<2x128xf32>
      %49 = arith.subf %34, %48 : vector<2x128xf32>
      %cst_28 = arith.constant 9.99999974E-6 : f32
      %50 = vector.broadcast %cst_28 : f32 to vector<2x1xf32>
      %51 = arith.addf %47, %50 : vector<2x1xf32>
      %52 = math.rsqrt %51 : vector<2x1xf32>
      %53 = vector.broadcast %52 : vector<2x1xf32> to vector<2x128xf32>
      %54 = arith.mulf %49, %53 : vector<2x128xf32>
      %55 = vector.extract_strided_slice %31 {offsets = [1, 0], sizes = [1, 128], strides = [1, 1]} : vector<3x128xf32> to vector<1x128xf32>
      %56 = vector.broadcast %55 : vector<1x128xf32> to vector<2x128xf32>
      %57 = arith.mulf %54, %56 : vector<2x128xf32>
      %58 = vector.extract_strided_slice %31 {offsets = [2, 0], sizes = [1, 128], strides = [1, 1]} : vector<3x128xf32> to vector<1x128xf32>
      %59 = vector.broadcast %58 : vector<1x128xf32> to vector<2x128xf32>
      %60 = arith.addf %57, %59 : vector<2x128xf32>
      %61 = math.tanh %60 : vector<2x128xf32>
      %c0_29 = arith.constant 0 : index
      %c0_30 = arith.constant 0 : index
      %62 = vector.load %arg8[%c0_29, %c0_30] : memref<2x128xf32, #tpu.memory_space<vmem>>, vector<2x128xf32>
      tpu.vector_store %arg8[%c0_29, %c0_30], %61 {strides = array<i32>} : memref<2x128xf32, #tpu.memory_space<vmem>>, vector<2x128xf32>,
    } else {
    }
    return
  }
  func.func @transform_0(%arg0: i32, %arg1: i32, %arg2: i32) -> (i32, i32) {
    %c1_i32 = arith.constant 1 : i32
    %0 = arith.muli %arg1, %c1_i32 : i32
    %1 = arith.addi %0, %arg2 : i32
    %c0_i32 = arith.constant 0 : i32
    return %arg0, %1 : i32, i32
  }
  func.func @transform_1(%arg0: i32, %arg1: i32, %arg2: i32) -> (i32, i32) {
    %c0_i32 = arith.constant 0 : i32
    %c0_i32_0 = arith.constant 0 : i32
    return %arg2, %c0_i32 : i32, i32
  }
  func.func @transform_2(%arg0: i32, %arg1: i32, %arg2: i32) -> (i32, i32) {
    %c0_i32 = arith.constant 0 : i32
    %c0_i32_0 = arith.constant 0 : i32
    %c0_i32_1 = arith.constant 0 : i32
    return %c0_i32, %c0_i32_0 : i32, i32
  }
  func.func @transform_3(%arg0: i32, %arg1: i32, %arg2: i32) -> (i32, i32) {
    %c0_i32 = arith.constant 0 : i32
    %c0_i32_0 = arith.constant 0 : i32
    %c0_i32_1 = arith.constant 0 : i32
    return %c0_i32, %c0_i32_0 : i32, i32
  }
  func.func @transform_4(%arg0: i32, %arg1: i32, %arg2: i32) -> (i32, i32) {
    %c0_i32 = arith.constant 0 : i32
    %c0_i32_0 = arith.constant 0 : i32
    %c0_i32_1 = arith.constant 0 : i32
    return %c0_i32, %c0_i32_0 : i32, i32
  }
  func.func @transform_5(%arg0: i32, %arg1: i32, %arg2: i32) -> (i32, i32) {
    %c0_i32 = arith.constant 0 : i32
    %c0_i32_0 = arith.constant 0 : i32
    return %arg0, %c0_i32 : i32, i32
  }
}

</mosaic_0001>

<llo_original>
// kernel: tpu_custom_call.1
$region0: #{tpu_custom_call.1}
  #allocation0 [shape = 'u32[]', space=smem, size = 0x4, offset = 0x4, fixed_abs, tag = 'smem constant byte address 0x4 - core index']
  #allocation1 [shape = 'u32[144,128]{1,0:T(1,128)}', space=vmem, size = 0x12000, scoped, tag = 'internal scratch']
  #allocation2 [shape = 'f32[2,2,384]{2,1,0:T(2,128)}', space=vmem, size = 0x1800, scoped, tag = 'scratch operand']
  %s0 = inlined_call_operand.hbm [shape: f32[2,1536], index: 0, kind: input, shape index: {}]
  %s1 = inlined_call_operand.hbm [shape: bf16[768,384], index: 1, kind: input, shape index: {}]
  %s2 = inlined_call_operand.hbm [shape: bf16[384,128], index: 2, kind: input, shape index: {}]
  %s3 = inlined_call_operand.hbm [shape: bf16[384,128], index: 3, kind: input, shape index: {}]
  %s4 = inlined_call_operand.vmem [shape: f32[3,128], index: 4, kind: input, shape index: {}]
  %s5 = inlined_call_operand.hbm [shape: f32[2,128], index: 5, kind: output, shape index: {}]
  %s6 = sld [smem:[#allocation0]]
  $region77: #{tpu_custom_call.1} parent=0
    _
  %s8 = ssub.s32 1, %s6
  %s9 = scalar_select 0, %s8, %s6
  $region1: #{tpu_custom_call.1} parent=0
    #allocation3 [shape = 'u8[12288]{0}', space=vmem, size = 0x3000, scoped, tag = 'input window, operand 0']
    #allocation4 [shape = 's32[2]{0}', space=sflag, size = 0x8, scoped, tag = 'scoped memory for tpu_custom_call.1']
    #allocation5 [shape = 's32[2]{0}', space=sflag, size = 0x8, scoped, tag = 'scoped memory for tpu_custom_call.1']
    #allocation6 [shape = 'u8[589824]{0}', space=vmem, size = 0x90000, scoped, tag = 'input window, operand 1, single buffered']
    #allocation7 [shape = 's32[1]{0}', space=sflag, size = 0x4, scoped, tag = 'scoped memory for tpu_custom_call.1']
    #allocation8 [shape = 'u8[98304]{0}', space=vmem, size = 0x18000, scoped, tag = 'input window, operand 2, single buffered']
    #allocation9 [shape = 'u8[98304]{0}', space=vmem, size = 0x18000, scoped, tag = 'input window, operand 3, single buffered']
    #allocation10 [shape = 's32[1]{0}', space=sflag, size = 0x4, scoped, tag = 'scoped memory for tpu_custom_call.1']
    #allocation11 [shape = 'u8[1024]{0}', space=vmem, size = 0x400, scoped, tag = 'output window, operand 0, single buffered']
    %10 = vsyncpa [#allocation4], 0
    %s11 = scalar_lea.sflag [#allocation4], 1
    %12 = vsyncpa %s11, 0
    %13 = vsyncpa [#allocation7], 0
    %14 = vsyncpa [#allocation10], 0
    %15 = vsyncpa [#allocation5], 0
    loop: start=0, step=1, limit=4
    $region2: #{tpu_custom_call.1} parent=1 // loop_pre_header
      _
    $region3: #{tpu_custom_call.1} parent=1 // loop_header
      %s17 = sphi 0, %s21
      %p18 = scmp.ge.s32.totalorder %s17, 4
      %s24 = sphi 0, %s43
      %s25 = sphi 0, %s39
      %s26 = sphi 0, %s35
      %s27 = sphi 0, %s24
      %s28 = sphi 0, %s25
      %s29 = sphi 0, %s26
      %s30 = sphi 0, %s27
      %s31 = sphi 0, %s28
      %s32 = sphi 0, %s29
      %s50 = sphi 0, %s52
      %s53 = sphi 0, %s50
      %s54 = sphi 0, %s53
      %s70 = sphi 0, %s54
      %s76 = sphi 0, %s78
      %s79 = sphi 0, %s76
      %s80 = sphi 0, %s79
      %s96 = sphi 0, %s80
      %s100 = sphi 0, %s100
      %s102 = sphi 0, %s100
      %s103 = sphi 0, %s102
      %s117 = sphi 0, %s103
      %s121 = sphi 0, %s121
      %s123 = sphi 0, %s121
      %s124 = sphi 0, %s123
      %s138 = sphi 0, %s124
      %s142 = sphi 0, %s142
      %s144 = sphi 0, %s142
      %s145 = sphi 0, %s144
      %s159 = sphi 0, %s145
      %s165 = sphi 0, %s167
      %s168 = sphi 0, %s165
      %s169 = sphi 0, %s168
      %s185 = sphi 0, %s169
    $region4: #{tpu_custom_call.1} parent=1 // loop_header_branch
      %20 = sbr.rel (%p18) target = $region8
    $region5: #{tpu_custom_call.1} parent=1 // loop_body
      %s22 = ssub.s32 %s17, 1
      %s23 = ssub.s32 %s17, 2
      %s33 = sadd.s32 1, %s26
      %p34 = scmp.ge.s32.totalorder %s33, 1
      %s35 = scalar_select %p34, 0, %s33
      %s36 = sadd.s32 1, %s25
      %s37 = scalar_select %p34, %s36, %s25
      %p38 = scmp.ge.s32.totalorder %s37, 2
      %s39 = scalar_select %p38, 0, %s37
      %s40 = sadd.s32 1, %s24
      %s41 = scalar_select %p38, %s40, %s24
      %p42 = scmp.ge.s32.totalorder %s41, 1
      %s43 = scalar_select %p42, 0, %s41
      %s44 = sadd.s32 %s25, %s26
      %s45 = sadd.s32 %s39, %s35
      %s46 = ssub.s32 %s24, %s43
      %s47 = ssub.s32 %s44, %s45
      %s48 = sor.u32 %s46, %s47
      %p49 = scmp.eq.s32.totalorder %s48, 0
      %s51 = sadd.s32 %s50, 1
      %s52 = scalar_select %p49, %s50, %s51
      %p55 = pneg %p49
      %p56 = scmp.eq.s32.totalorder %s17, 1
      %p57 = por %p55, %p56
      %p58 = scmp.ne.s32.totalorder %s50, %s53
      %p59 = scmp.eq.s32.totalorder %s17, 0
      %p60 = por %p58, %p59
      %p61 = scmp.ne.s32.totalorder %s50, %s53
      %p62 = scmp.eq.s32.totalorder %s22, 1
      %p63 = por %p61, %p62
      %p64 = scmp.ne.s32.totalorder %s53, %s54
      %p65 = scmp.eq.s32.totalorder %s22, 0
      %p66 = por %p64, %p65
      %p67 = scmp.ne.s32.totalorder %s53, %s54
      %p68 = scmp.eq.s32.totalorder %s23, 1
      %p69 = por %p67, %p68
      %p71 = scmp.ne.s32.totalorder %s54, %s70
      %p72 = scmp.eq.s32.totalorder %s23, 0
      %p73 = por %p71, %p72
      %s74 = ssub.s32 %s26, %s35
      %p75 = scmp.eq.s32.totalorder %s74, 0
      %s77 = sadd.s32 %s76, 1
      %s78 = scalar_select %p75, %s76, %s77
      %p81 = pneg %p75
      %p82 = scmp.eq.s32.totalorder %s17, 1
      %p83 = por %p81, %p82
      %p84 = scmp.ne.s32.totalorder %s76, %s79
      %p85 = scmp.eq.s32.totalorder %s17, 0
      %p86 = por %p84, %p85
      %p87 = scmp.ne.s32.totalorder %s76, %s79
      %p88 = scmp.eq.s32.totalorder %s22, 1
      %p89 = por %p87, %p88
      %p90 = scmp.ne.s32.totalorder %s79, %s80
      %p91 = scmp.eq.s32.totalorder %s22, 0
      %p92 = por %p90, %p91
      %p93 = scmp.ne.s32.totalorder %s79, %s80
      %p94 = scmp.eq.s32.totalorder %s23, 1
      %p95 = por %p93, %p94
      %p97 = scmp.ne.s32.totalorder %s80, %s96
      %p98 = scmp.eq.s32.totalorder %s23, 0
      %p99 = por %p97, %p98
      %s101 = sadd.s32 %s100, 1
      %p104 = scmp.eq.s32.totalorder %s17, 1
      %p105 = scmp.ne.s32.totalorder %s100, %s102
      %p106 = scmp.eq.s32.totalorder %s17, 0
      %p107 = por %p105, %p106
      %p108 = scmp.ne.s32.totalorder %s100, %s102
      %p109 = scmp.eq.s32.totalorder %s22, 1
      %p110 = por %p108, %p109
      %p111 = scmp.ne.s32.totalorder %s102, %s103
      %p112 = scmp.eq.s32.totalorder %s22, 0
      %p113 = por %p111, %p112
      %p114 = scmp.ne.s32.totalorder %s102, %s103
      %p115 = scmp.eq.s32.totalorder %s23, 1
      %p116 = por %p114, %p115
      %p118 = scmp.ne.s32.totalorder %s103, %s117
      %p119 = scmp.eq.s32.totalorder %s23, 0
      %p120 = por %p118, %p119
      %s122 = sadd.s32 %s121, 1
      %p125 = scmp.eq.s32.totalorder %s17, 1
      %p126 = scmp.ne.s32.totalorder %s121, %s123
      %p127 = scmp.eq.s32.totalorder %s17, 0
      %p128 = por %p126, %p127
      %p129 = scmp.ne.s32.totalorder %s121, %s123
      %p130 = scmp.eq.s32.totalorder %s22, 1
      %p131 = por %p129, %p130
      %p132 = scmp.ne.s32.totalorder %s123, %s124
      %p133 = scmp.eq.s32.totalorder %s22, 0
      %p134 = por %p132, %p133
      %p135 = scmp.ne.s32.totalorder %s123, %s124
      %p136 = scmp.eq.s32.totalorder %s23, 1
      %p137 = por %p135, %p136
      %p139 = scmp.ne.s32.totalorder %s124, %s138
      %p140 = scmp.eq.s32.totalorder %s23, 0
      %p141 = por %p139, %p140
      %s143 = sadd.s32 %s142, 1
      %p146 = scmp.eq.s32.totalorder %s17, 1
      %p147 = scmp.ne.s32.totalorder %s142, %s144
      %p148 = scmp.eq.s32.totalorder %s17, 0
      %p149 = por %p147, %p148
      %p150 = scmp.ne.s32.totalorder %s142, %s144
      %p151 = scmp.eq.s32.totalorder %s22, 1
      %p152 = por %p150, %p151
      %p153 = scmp.ne.s32.totalorder %s144, %s145
      %p154 = scmp.eq.s32.totalorder %s22, 0
      %p155 = por %p153, %p154
      %p156 = scmp.ne.s32.totalorder %s144, %s145
      %p157 = scmp.eq.s32.totalorder %s23, 1
      %p158 = por %p156, %p157
      %p160 = scmp.ne.s32.totalorder %s145, %s159
      %p161 = scmp.eq.s32.totalorder %s23, 0
      %p162 = por %p160, %p161
      %s163 = ssub.s32 %s24, %s43
      %p164 = scmp.eq.s32.totalorder %s163, 0
      %s166 = sadd.s32 %s165, 1
      %s167 = scalar_select %p164, %s165, %s166
      %p170 = pneg %p164
      %p171 = scmp.eq.s32.totalorder %s17, 1
      %p172 = por %p170, %p171
      %p173 = scmp.ne.s32.totalorder %s165, %s168
      %p174 = scmp.eq.s32.totalorder %s17, 0
      %p175 = por %p173, %p174
      %p176 = scmp.ne.s32.totalorder %s165, %s168
      %p177 = scmp.eq.s32.totalorder %s22, 1
      %p178 = por %p176, %p177
      %p179 = scmp.ne.s32.totalorder %s168, %s169
      %p180 = scmp.eq.s32.totalorder %s22, 0
      %p181 = por %p179, %p180
      %p182 = scmp.ne.s32.totalorder %s168, %s169
      %p183 = scmp.eq.s32.totalorder %s23, 1
      %p184 = por %p182, %p183
      %p186 = scmp.ne.s32.totalorder %s169, %s185
      %p187 = scmp.eq.s32.totalorder %s23, 0
      %p188 = por %p186, %p187
      %p189 = scmp.le.s32.totalorder 1, %s17
      %p190 = scmp.lt.s32.totalorder %s17, 3
      %p191 = pnand %p189, %p190
      %p192 = pneg %p191
      // Predicated region
      $region9: #{tpu_custom_call.1} parent=5 // pred_check
        _
      $region10: #{tpu_custom_call.1} parent=5 // pred_check_branch
        %194 = sbr.rel (%p191) target = $region12
      $region11: #{tpu_custom_call.1} parent=5 // pred_region
        %s195 = ssub.s32 %s17, 1
        // Predicated region
        $region13: #{tpu_custom_call.1} parent=11 // pred_check
          %p196 = pneg %p92
        $region14: #{tpu_custom_call.1} parent=11 // pred_check_branch
          %198 = sbr.rel (%p196) target = $region16
        $region15: #{tpu_custom_call.1} parent=11 // pred_region
          %s199 = smul.u32 96, %s29
          %s201 = ssub.s32 18432, 18432
          %202 = vsyncadd [#allocation7], %s201
          %s203 = smul.addr %s199, 3
          %s204 = smul.addr %s203, 64
          %s205 = scalar_lea.hbm %s1, %s204
          %s206 = sshll.u32 [#allocation6], 4
          %s207 = int_to_ptr.vmem [resolvable:$true] %s206
          %212 = dma.hbm_to_vmem [thread:$0]  %s205, 18432, %s207, [#allocation7], 192, 192, 12
        $region16: #{tpu_custom_call.1} parent=11 // pred_fallthru
          _
        // Predicated region
        $region17: #{tpu_custom_call.1} parent=11 // pred_check
          %p213 = pneg %p113
        $region18: #{tpu_custom_call.1} parent=11 // pred_check_branch
          %215 = sbr.rel (%p213) target = $region20
        $region19: #{tpu_custom_call.1} parent=11 // pred_region
          %s217 = ssub.s32 3072, 3072
          %218 = vsyncadd [#allocation7], %s217
          %s219 = sshll.u32 [#allocation8], 4
          %s220 = int_to_ptr.vmem [resolvable:$true] %s219
          %225 = dma.hbm_to_vmem [thread:$0]  %s2, 3072, %s220, [#allocation7], 64, 64, 4
        $region20: #{tpu_custom_call.1} parent=11 // pred_fallthru
          _
        // Predicated region
        $region21: #{tpu_custom_call.1} parent=11 // pred_check
          %p226 = pneg %p134
        $region22: #{tpu_custom_call.1} parent=11 // pred_check_branch
          %228 = sbr.rel (%p226) target = $region24
        $region23: #{tpu_custom_call.1} parent=11 // pred_region
          %s230 = ssub.s32 3072, 3072
          %231 = vsyncadd [#allocation10], %s230
          %s232 = sshll.u32 [#allocation9], 4
          %s233 = int_to_ptr.vmem [resolvable:$true] %s232
          %238 = dma.hbm_to_vmem [thread:$0]  %s3, 3072, %s233, [#allocation10], 64, 64, 4
        $region24: #{tpu_custom_call.1} parent=11 // pred_fallthru
          _
        // Predicated region
        $region25: #{tpu_custom_call.1} parent=11 // pred_check
          %p239 = pneg %p155
        $region26: #{tpu_custom_call.1} parent=11 // pred_check_branch
          %241 = sbr.rel (%p239) target = $region28
        $region27: #{tpu_custom_call.1} parent=11 // pred_region
          _
        $region28: #{tpu_custom_call.1} parent=11 // pred_fallthru
          _
      $region12: #{tpu_custom_call.1} parent=5 // pred_fallthru
        _
      %p242 = scmp.lt.s32.totalorder %s17, 2
      // Predicated region
      $region29: #{tpu_custom_call.1} parent=5 // pred_check
        %p243 = pneg %p242
      $region30: #{tpu_custom_call.1} parent=5 // pred_check_branch
        %245 = sbr.rel (%p243) target = $region32
      $region31: #{tpu_custom_call.1} parent=5 // pred_region
        // Predicated region
        $region33: #{tpu_custom_call.1} parent=31 // pred_check
          %p246 = pneg %p60
        $region34: #{tpu_custom_call.1} parent=31 // pred_check_branch
          %248 = sbr.rel (%p246) target = $region36
        $region35: #{tpu_custom_call.1} parent=31 // pred_region
          %s249 = sand.u32 %s50, 1
          %s250 = scalar_lea.sflag [#allocation4], %s249
          %s251 = sand.u32 %s50, 1
          %s252 = smul.addr %s251, 12
          %s253 = scalar_lea.vmem [#allocation3], %s252
          %s254 = sadd.s32 %s25, %s26
          %s255 = smul.u32 6, %s254
          %s257 = ssub.s32 192, 192
          %258 = vsyncadd %s250, %s257
          %s259 = smul.addr %s24, 12
          %s260 = sadd.s32 %s255, %s259
          %s261 = smul.addr %s260, 32
          %s262 = scalar_lea.hbm %s0, %s261
          %s264 = sshll.u32 %s253, 4
          %s265 = int_to_ptr.vmem [resolvable:$true] %s264
          %267 = dma.hbm_to_vmem [thread:$0]  %s262, 192, %s265, %s250
        $region36: #{tpu_custom_call.1} parent=31 // pred_fallthru
          _
      $region32: #{tpu_custom_call.1} parent=5 // pred_fallthru
        _
      %p268 = scmp.le.s32.totalorder 1, %s17
      %p269 = scmp.lt.s32.totalorder %s17, 3
      %p270 = pnand %p268, %p269
      %p271 = pneg %p270
      // Predicated region
      $region37: #{tpu_custom_call.1} parent=5 // pred_check
        _
      $region38: #{tpu_custom_call.1} parent=5 // pred_check_branch
        %273 = sbr.rel (%p270) target = $region40
      $region39: #{tpu_custom_call.1} parent=5 // pred_region
        %s274 = ssub.s32 %s17, 1
        %s275 = sand.u32 %s53, 1
        %s276 = scalar_lea.sflag [#allocation4], %s275
        %s277 = sand.u32 %s53, 1
        %s278 = smul.addr %s277, 12
        %s279 = scalar_lea.vmem [#allocation3], %s278
        // Predicated region
        $region41: #{tpu_custom_call.1} parent=39 // pred_check
          %p280 = pneg %p66
        $region42: #{tpu_custom_call.1} parent=39 // pred_check_branch
          %282 = sbr.rel (%p280) target = $region44
        $region43: #{tpu_custom_call.1} parent=39 // pred_region
          %283 = dma.done %s276, 192
        $region44: #{tpu_custom_call.1} parent=39 // pred_fallthru
          _
        // Predicated region
        $region45: #{tpu_custom_call.1} parent=39 // pred_check
          %p284 = pneg %p92
        $region46: #{tpu_custom_call.1} parent=39 // pred_check_branch
          %286 = sbr.rel (%p284) target = $region48
        $region47: #{tpu_custom_call.1} parent=39 // pred_region
          %287 = dma.done [#allocation7], 18432
        $region48: #{tpu_custom_call.1} parent=39 // pred_fallthru
          _
        // Predicated region
        $region49: #{tpu_custom_call.1} parent=39 // pred_check
          %p288 = pneg %p113
        $region50: #{tpu_custom_call.1} parent=39 // pred_check_branch
          %290 = sbr.rel (%p288) target = $region52
        $region51: #{tpu_custom_call.1} parent=39 // pred_region
          %291 = dma.done [#allocation7], 3072
        $region52: #{tpu_custom_call.1} parent=39 // pred_fallthru
          _
        // Predicated region
        $region53: #{tpu_custom_call.1} parent=39 // pred_check
          %p292 = pneg %p134
        $region54: #{tpu_custom_call.1} parent=39 // pred_check_branch
          %294 = sbr.rel (%p292) target = $region56
        $region55: #{tpu_custom_call.1} parent=39 // pred_region
          %295 = dma.done [#allocation10], 3072
        $region56: #{tpu_custom_call.1} parent=39 // pred_fallthru
          _
        %s296 = sand.u32 %s53, 1
        %s297 = scalar_lea.sflag [#allocation4], %s296
        %s298 = sand.u32 %s53, 1
        %s299 = smul.addr %s298, 12
        %s300 = scalar_lea.vmem [#allocation3], %s299
        %p301 = pneg %p66
        %p302 = pneg %p63
        %p303 = pneg %p92
        %p304 = pneg %p89
        %p305 = pneg %p113
        %p306 = pneg %p110
        %p307 = pneg %p134
        %p308 = pneg %p131
        %p309 = pneg %p155
        %p310 = pneg %p152
        %p311 = pneg %p181
        %p312 = pneg %p178
        %s313 = sadd.s32 %s28, %s29
        %s314 = smul.u32 6, %s313
        %s315 = smul.u32 96, %s29
        %p317 = scmp.eq.s32.totalorder %s29, 0
        // Predicated region
        $region57: #{tpu_custom_call.1} parent=39 // pred_check
          %p318 = pneg %p317
        $region58: #{tpu_custom_call.1} parent=39 // pred_check_branch
          %320 = sbr.rel (%p318) target = $region60
        $region59: #{tpu_custom_call.1} parent=39 // pred_region
          %s321 = smul.u32 %s28, 3
          %s322 = smul.addr %s321, 2
          %s323 = scalar_lea.vmem [#allocation2], %s322
          %324 = vst [vmem:[%s323] sm:$0x3f] 0.0
        $region60: #{tpu_custom_call.1} parent=39 // pred_fallthru
          _
        %s325 = smul.u32 %s28, 3
        %s326 = smul.addr %s325, 2
        %s327 = scalar_lea.vmem [#allocation2], %s326
        %v328 = vld [vmem:[%s327] sm:$0x3f]
        %v329 = vld [vmem:[%s279] sm:$0xff]
        %v330 = vld [vmem:[%s279 + $0x8] sm:$0xf]
        %v333 = vcombine.high %v329, %v329
        %v335 = vunpack.c.l.s4 1983009808
        %v336 = vunpack.c.0.s8 %v335
        %v337 = vlaneseq
        %v338 = vshrl.u32 %v337, 7
        %v339 = vsub.s32 %v336, %v338
        %v340 = vrot.slane %v329, %v339
        %v342 = vunpack.c.l.s4 1983009808
        %v343 = vunpack.c.0.s8 %v342
        %v344 = vlaneseq
        %v345 = vshrl.u32 %v344, 7
        %v346 = vsub.s32 %v343, %v345
        %v347 = vrot.slane %v333, %v346
        %v348 = vcombine.high %v340, %v340
        %v349 = vcombine.high %v347, %v347
        %v351 = vunpack.c.l.s4 1983009808
        %v352 = vunpack.c.0.s8 %v351
        %v353 = vlaneseq
        %v354 = vshrl.u32 %v353, 7
        %v355 = vsub.s32 %v352, %v354
        %v356 = vrot.slane %v330, %v355
        %v357 = vcombine.high %v356, %v356
        %v364 = vpack.c.bf16 %v340, %v340
        %v365 = vpack.c.bf16 %v348, %v348
        %v366 = vpack.c.bf16 %v347, %v347
        %v367 = vpack.c.bf16 %v349, %v349
        %v368 = vpack.c.bf16 %v356, %v356
        %v369 = vpack.c.bf16 %v357, %v357
        %v370 = vld [vmem:[#allocation6] sm:$0xff]
        %v371 = vld [vmem:[#allocation6 + $0x8] sm:$0xf]
        %v372 = vld [vmem:[#allocation6 + $0xc] sm:$0xff]
        %v373 = vld [vmem:[#allocation6 + $0x14] sm:$0xf]
        %v374 = vld [vmem:[#allocation6 + $0x18] sm:$0xff]
        %v375 = vld [vmem:[#allocation6 + $0x20] sm:$0xf]
        %v376 = vld [vmem:[#allocation6 + $0x24] sm:$0xff]
        %v377 = vld [vmem:[#allocation6 + $0x2c] sm:$0xf]
        %v378 = vld [vmem:[#allocation6 + $0x30] sm:$0xff]
        %v379 = vld [vmem:[#allocation6 + $0x38] sm:$0xf]
        %v380 = vld [vmem:[#allocation6 + $0x3c] sm:$0xff]
        %v381 = vld [vmem:[#allocation6 + $0x44] sm:$0xf]
        %v382 = vld [vmem:[#allocation6 + $0x48] sm:$0xff]
        %v383 = vld [vmem:[#allocation6 + $0x50] sm:$0xf]
        %v384 = vld [vmem:[#allocation6 + $0x54] sm:$0xff]
        %v385 = vld [vmem:[#allocation6 + $0x5c] sm:$0xf]
        %v386 = vld [vmem:[#allocation6 + $0x60] sm:$0xff]
        %v387 = vld [vmem:[#allocation6 + $0x68] sm:$0xf]
        %v388 = vld [vmem:[#allocation6 + $0x6c] sm:$0xff]
        %v389 = vld [vmem:[#allocation6 + $0x74] sm:$0xf]
        %v390 = vld [vmem:[#allocation6 + $0x78] sm:$0xff]
        %v391 = vld [vmem:[#allocation6 + $0x80] sm:$0xf]
        %v392 = vld [vmem:[#allocation6 + $0x84] sm:$0xff]
        %v393 = vld [vmem:[#allocation6 + $0x8c] sm:$0xf]
        %v394 = vld [vmem:[#allocation6 + $0x90] sm:$0xff]
        %v395 = vld [vmem:[#allocation6 + $0x98] sm:$0xf]
        %v396 = vld [vmem:[#allocation6 + $0x9c] sm:$0xff]
        %v397 = vld [vmem:[#allocation6 + $0xa4] sm:$0xf]
        %v398 = vld [vmem:[#allocation6 + $0xa8] sm:$0xff]
        %v399 = vld [vmem:[#allocation6 + $0xb0] sm:$0xf]
        %v400 = vld [vmem:[#allocation6 + $0xb4] sm:$0xff]
        %v401 = vld [vmem:[#allocation6 + $0xbc] sm:$0xf]
        %v402 = vld [vmem:[#allocation6 + $0xc0] sm:$0xff]
        %v403 = vld [vmem:[#allocation6 + $0xc8] sm:$0xf]
        %v404 = vld [vmem:[#allocation6 + $0xcc] sm:$0xff]
        %v405 = vld [vmem:[#allocation6 + $0xd4] sm:$0xf]
        %v406 = vld [vmem:[#allocation6 + $0xd8] sm:$0xff]
        %v407 = vld [vmem:[#allocation6 + $0xe0] sm:$0xf]
        %v408 = vld [vmem:[#allocation6 + $0xe4] sm:$0xff]
        %v409 = vld [vmem:[#allocation6 + $0xec] sm:$0xf]
        %v410 = vld [vmem:[#allocation6 + $0xf0] sm:$0xff]
        %v411 = vld [vmem:[#allocation6 + $0xf8] sm:$0xf]
        %v412 = vld [vmem:[#allocation6 + $0xfc] sm:$0xff]
        %v413 = vld [vmem:[#allocation6 + $0x104] sm:$0xf]
        %v414 = vld [vmem:[#allocation6 + $0x108] sm:$0xff]
        %v415 = vld [vmem:[#allocation6 + $0x110] sm:$0xf]
        %v416 = vld [vmem:[#allocation6 + $0x114] sm:$0xff]
        %v417 = vld [vmem:[#allocation6 + $0x11c] sm:$0xf]
        %v418 = vld [vmem:[#allocation6 + $0x120] sm:$0xff]
        %v419 = vld [vmem:[#allocation6 + $0x128] sm:$0xf]
        %v420 = vld [vmem:[#allocation6 + $0x12c] sm:$0xff]
        %v421 = vld [vmem:[#allocation6 + $0x134] sm:$0xf]
        %v422 = vld [vmem:[#allocation6 + $0x138] sm:$0xff]
        %v423 = vld [vmem:[#allocation6 + $0x140] sm:$0xf]
        %v424 = vld [vmem:[#allocation6 + $0x144] sm:$0xff]
        %v425 = vld [vmem:[#allocation6 + $0x14c] sm:$0xf]
        %v426 = vld [vmem:[#allocation6 + $0x150] sm:$0xff]
        %v427 = vld [vmem:[#allocation6 + $0x158] sm:$0xf]
        %v428 = vld [vmem:[#allocation6 + $0x15c] sm:$0xff]
        %v429 = vld [vmem:[#allocation6 + $0x164] sm:$0xf]
        %v430 = vld [vmem:[#allocation6 + $0x168] sm:$0xff]
        %v431 = vld [vmem:[#allocation6 + $0x170] sm:$0xf]
        %v432 = vld [vmem:[#allocation6 + $0x174] sm:$0xff]
        %v433 = vld [vmem:[#allocation6 + $0x17c] sm:$0xf]
        %v434 = vld [vmem:[#allocation6 + $0x180] sm:$0xff]
        %v435 = vld [vmem:[#allocation6 + $0x188] sm:$0xf]
        %v436 = vld [vmem:[#allocation6 + $0x18c] sm:$0xff]
        %v437 = vld [vmem:[#allocation6 + $0x194] sm:$0xf]
        %v438 = vld [vmem:[#allocation6 + $0x198] sm:$0xff]
        %v439 = vld [vmem:[#allocation6 + $0x1a0] sm:$0xf]
        %v440 = vld [vmem:[#allocation6 + $0x1a4] sm:$0xff]
        %v441 = vld [vmem:[#allocation6 + $0x1ac] sm:$0xf]
        %v442 = vld [vmem:[#allocation6 + $0x1b0] sm:$0xff]
        %v443 = vld [vmem:[#allocation6 + $0x1b8] sm:$0xf]
        %v444 = vld [vmem:[#allocation6 + $0x1bc] sm:$0xff]
        %v445 = vld [vmem:[#allocation6 + $0x1c4] sm:$0xf]
        %v446 = vld [vmem:[#allocation6 + $0x1c8] sm:$0xff]
        %v447 = vld [vmem:[#allocation6 + $0x1d0] sm:$0xf]
        %v448 = vld [vmem:[#allocation6 + $0x1d4] sm:$0xff]
        %v449 = vld [vmem:[#allocation6 + $0x1dc] sm:$0xf]
        %v450 = vld [vmem:[#allocation6 + $0x1e0] sm:$0xff]
        %v451 = vld [vmem:[#allocation6 + $0x1e8] sm:$0xf]
        %v452 = vld [vmem:[#allocation6 + $0x1ec] sm:$0xff]
        %v453 = vld [vmem:[#allocation6 + $0x1f4] sm:$0xf]
        %v454 = vld [vmem:[#allocation6 + $0x1f8] sm:$0xff]
        %v455 = vld [vmem:[#allocation6 + $0x200] sm:$0xf]
        %v456 = vld [vmem:[#allocation6 + $0x204] sm:$0xff]
        %v457 = vld [vmem:[#allocation6 + $0x20c] sm:$0xf]
        %v458 = vld [vmem:[#allocation6 + $0x210] sm:$0xff]
        %v459 = vld [vmem:[#allocation6 + $0x218] sm:$0xf]
        %v460 = vld [vmem:[#allocation6 + $0x21c] sm:$0xff]
        %v461 = vld [vmem:[#allocation6 + $0x224] sm:$0xf]
        %v462 = vld [vmem:[#allocation6 + $0x228] sm:$0xff]
        %v463 = vld [vmem:[#allocation6 + $0x230] sm:$0xf]
        %v464 = vld [vmem:[#allocation6 + $0x234] sm:$0xff]
        %v465 = vld [vmem:[#allocation6 + $0x23c] sm:$0xf]
        %v466 = vld [vmem:[#allocation6 + $0x240] sm:$0xff]
        %v467 = vld [vmem:[#allocation6 + $0x248] sm:$0xf]
        %v468 = vld [vmem:[#allocation6 + $0x24c] sm:$0xff]
        %v469 = vld [vmem:[#allocation6 + $0x254] sm:$0xf]
        %v470 = vld [vmem:[#allocation6 + $0x258] sm:$0xff]
        %v471 = vld [vmem:[#allocation6 + $0x260] sm:$0xf]
        %v472 = vld [vmem:[#allocation6 + $0x264] sm:$0xff]
        %v473 = vld [vmem:[#allocation6 + $0x26c] sm:$0xf]
        %v474 = vld [vmem:[#allocation6 + $0x270] sm:$0xff]
        %v475 = vld [vmem:[#allocation6 + $0x278] sm:$0xf]
        %v476 = vld [vmem:[#allocation6 + $0x27c] sm:$0xff]
        %v477 = vld [vmem:[#allocation6 + $0x284] sm:$0xf]
        %v478 = vld [vmem:[#allocation6 + $0x288] sm:$0xff]
        %v479 = vld [vmem:[#allocation6 + $0x290] sm:$0xf]
        %v480 = vld [vmem:[#allocation6 + $0x294] sm:$0xff]
        %v481 = vld [vmem:[#allocation6 + $0x29c] sm:$0xf]
        %v482 = vld [vmem:[#allocation6 + $0x2a0] sm:$0xff]
        %v483 = vld [vmem:[#allocation6 + $0x2a8] sm:$0xf]
        %v484 = vld [vmem:[#allocation6 + $0x2ac] sm:$0xff]
        %v485 = vld [vmem:[#allocation6 + $0x2b4] sm:$0xf]
        %v486 = vld [vmem:[#allocation6 + $0x2b8] sm:$0xff]
        %v487 = vld [vmem:[#allocation6 + $0x2c0] sm:$0xf]
        %v488 = vld [vmem:[#allocation6 + $0x2c4] sm:$0xff]
        %v489 = vld [vmem:[#allocation6 + $0x2cc] sm:$0xf]
        %v490 = vld [vmem:[#allocation6 + $0x2d0] sm:$0xff]
        %v491 = vld [vmem:[#allocation6 + $0x2d8] sm:$0xf]
        %v492 = vld [vmem:[#allocation6 + $0x2dc] sm:$0xff]
        %v493 = vld [vmem:[#allocation6 + $0x2e4] sm:$0xf]
        %v494 = vld [vmem:[#allocation6 + $0x2e8] sm:$0xff]
        %v495 = vld [vmem:[#allocation6 + $0x2f0] sm:$0xf]
        %v496 = vld [vmem:[#allocation6 + $0x2f4] sm:$0xff]
        %v497 = vld [vmem:[#allocation6 + $0x2fc] sm:$0xf]
        %v498 = vld [vmem:[#allocation6 + $0x300] sm:$0xff]
        %v499 = vld [vmem:[#allocation6 + $0x308] sm:$0xf]
        %v500 = vld [vmem:[#allocation6 + $0x30c] sm:$0xff]
        %v501 = vld [vmem:[#allocation6 + $0x314] sm:$0xf]
        %v502 = vld [vmem:[#allocation6 + $0x318] sm:$0xff]
        %v503 = vld [vmem:[#allocation6 + $0x320] sm:$0xf]
        %v504 = vld [vmem:[#allocation6 + $0x324] sm:$0xff]
        %v505 = vld [vmem:[#allocation6 + $0x32c] sm:$0xf]
        %v506 = vld [vmem:[#allocation6 + $0x330] sm:$0xff]
        %v507 = vld [vmem:[#allocation6 + $0x338] sm:$0xf]
        %v508 = vld [vmem:[#allocation6 + $0x33c] sm:$0xff]
        %v509 = vld [vmem:[#allocation6 + $0x344] sm:$0xf]
        %v510 = vld [vmem:[#allocation6 + $0x348] sm:$0xff]
        %v511 = vld [vmem:[#allocation6 + $0x350] sm:$0xf]
        %v512 = vld [vmem:[#allocation6 + $0x354] sm:$0xff]
        %v513 = vld [vmem:[#allocation6 + $0x35c] sm:$0xf]
        %v514 = vld [vmem:[#allocation6 + $0x360] sm:$0xff]
        %v515 = vld [vmem:[#allocation6 + $0x368] sm:$0xf]
        %v516 = vld [vmem:[#allocation6 + $0x36c] sm:$0xff]
        %v517 = vld [vmem:[#allocation6 + $0x374] sm:$0xf]
        %v518 = vld [vmem:[#allocation6 + $0x378] sm:$0xff]
        %v519 = vld [vmem:[#allocation6 + $0x380] sm:$0xf]
        %v520 = vld [vmem:[#allocation6 + $0x384] sm:$0xff]
        %v521 = vld [vmem:[#allocation6 + $0x38c] sm:$0xf]
        %v522 = vld [vmem:[#allocation6 + $0x390] sm:$0xff]
        %v523 = vld [vmem:[#allocation6 + $0x398] sm:$0xf]
        %v524 = vld [vmem:[#allocation6 + $0x39c] sm:$0xff]
        %v525 = vld [vmem:[#allocation6 + $0x3a4] sm:$0xf]
        %v526 = vld [vmem:[#allocation6 + $0x3a8] sm:$0xff]
        %v527 = vld [vmem:[#allocation6 + $0x3b0] sm:$0xf]
        %v528 = vld [vmem:[#allocation6 + $0x3b4] sm:$0xff]
        %v529 = vld [vmem:[#allocation6 + $0x3bc] sm:$0xf]
        %v530 = vld [vmem:[#allocation6 + $0x3c0] sm:$0xff]
        %v531 = vld [vmem:[#allocation6 + $0x3c8] sm:$0xf]
        %v532 = vld [vmem:[#allocation6 + $0x3cc] sm:$0xff]
        %v533 = vld [vmem:[#allocation6 + $0x3d4] sm:$0xf]
        %v534 = vld [vmem:[#allocation6 + $0x3d8] sm:$0xff]
        %v535 = vld [vmem:[#allocation6 + $0x3e0] sm:$0xf]
        %v536 = vld [vmem:[#allocation6 + $0x3e4] sm:$0xff]
        %v537 = vld [vmem:[#allocation6 + $0x3ec] sm:$0xf]
        %v538 = vld [vmem:[#allocation6 + $0x3f0] sm:$0xff]
        %v539 = vld [vmem:[#allocation6 + $0x3f8] sm:$0xf]
        %v540 = vld [vmem:[#allocation6 + $0x3fc] sm:$0xff]
        %v541 = vld [vmem:[#allocation6 + $0x404] sm:$0xf]
        %v542 = vld [vmem:[#allocation6 + $0x408] sm:$0xff]
        %v543 = vld [vmem:[#allocation6 + $0x410] sm:$0xf]
        %v544 = vld [vmem:[#allocation6 + $0x414] sm:$0xff]
        %v545 = vld [vmem:[#allocation6 + $0x41c] sm:$0xf]
        %v546 = vld [vmem:[#allocation6 + $0x420] sm:$0xff]
        %v547 = vld [vmem:[#allocation6 + $0x428] sm:$0xf]
        %v548 = vld [vmem:[#allocation6 + $0x42c] sm:$0xff]
        %v549 = vld [vmem:[#allocation6 + $0x434] sm:$0xf]
        %v550 = vld [vmem:[#allocation6 + $0x438] sm:$0xff]
        %v551 = vld [vmem:[#allocation6 + $0x440] sm:$0xf]
        %v552 = vld [vmem:[#allocation6 + $0x444] sm:$0xff]
        %v553 = vld [vmem:[#allocation6 + $0x44c] sm:$0xf]
        %v554 = vld [vmem:[#allocation6 + $0x450] sm:$0xff]
        %v555 = vld [vmem:[#allocation6 + $0x458] sm:$0xf]
        %v556 = vld [vmem:[#allocation6 + $0x45c] sm:$0xff]
        %v557 = vld [vmem:[#allocation6 + $0x464] sm:$0xf]
        %v558 = vld [vmem:[#allocation6 + $0x468] sm:$0xff]
        %v559 = vld [vmem:[#allocation6 + $0x470] sm:$0xf]
        %v560 = vld [vmem:[#allocation6 + $0x474] sm:$0xff]
        %v561 = vld [vmem:[#allocation6 + $0x47c] sm:$0xf]
        %v754 = vunpack.c.l.b16 %v370
        %v755 = vunpack.c.h.b16 %v370
        %v756 = vunpack.c.l.b16 %v371
        %v757 = vunpack.c.l.b16 %v372
        %v758 = vunpack.c.h.b16 %v372
        %v759 = vunpack.c.l.b16 %v373
        %v760 = vunpack.c.l.b16 %v374
        %v761 = vunpack.c.h.b16 %v374
        %v762 = vunpack.c.l.b16 %v375
        %v763 = vunpack.c.l.b16 %v376
        %v764 = vunpack.c.h.b16 %v376
        %v765 = vunpack.c.l.b16 %v377
        %v766 = vunpack.c.l.b16 %v378
        %v767 = vunpack.c.h.b16 %v378
        %v768 = vunpack.c.l.b16 %v379
        %v769 = vunpack.c.l.b16 %v380
        %v770 = vunpack.c.h.b16 %v380
        %v771 = vunpack.c.l.b16 %v381
        %v772 = vunpack.c.l.b16 %v382
        %v773 = vunpack.c.h.b16 %v382
        %v774 = vunpack.c.l.b16 %v383
        %v775 = vunpack.c.l.b16 %v384
        %v776 = vunpack.c.h.b16 %v384
        %v777 = vunpack.c.l.b16 %v385
        %v778 = vunpack.c.l.b16 %v386
        %v779 = vunpack.c.h.b16 %v386
        %v780 = vunpack.c.l.b16 %v387
        %v781 = vunpack.c.l.b16 %v388
        %v782 = vunpack.c.h.b16 %v388
        %v783 = vunpack.c.l.b16 %v389
        %v784 = vunpack.c.l.b16 %v390
        %v785 = vunpack.c.h.b16 %v390
        %v786 = vunpack.c.l.b16 %v391
        %v787 = vunpack.c.l.b16 %v392
        %v788 = vunpack.c.h.b16 %v392
        %v789 = vunpack.c.l.b16 %v393
        %v790 = vunpack.c.l.b16 %v394
        %v791 = vunpack.c.h.b16 %v394
        %v792 = vunpack.c.l.b16 %v395
        %v793 = vunpack.c.l.b16 %v396
        %v794 = vunpack.c.h.b16 %v396
        %v795 = vunpack.c.l.b16 %v397
        %v796 = vunpack.c.l.b16 %v398
        %v797 = vunpack.c.h.b16 %v398
        %v798 = vunpack.c.l.b16 %v399
        %v799 = vunpack.c.l.b16 %v400
        %v800 = vunpack.c.h.b16 %v400
        %v801 = vunpack.c.l.b16 %v401
        %v802 = vunpack.c.l.b16 %v402
        %v803 = vunpack.c.h.b16 %v402
        %v804 = vunpack.c.l.b16 %v403
        %v805 = vunpack.c.l.b16 %v404
        %v806 = vunpack.c.h.b16 %v404
        %v807 = vunpack.c.l.b16 %v405
        %v808 = vunpack.c.l.b16 %v406
        %v809 = vunpack.c.h.b16 %v406
        %v810 = vunpack.c.l.b16 %v407
        %v811 = vunpack.c.l.b16 %v408
        %v812 = vunpack.c.h.b16 %v408
        %v813 = vunpack.c.l.b16 %v409
        %v814 = vunpack.c.l.b16 %v410
        %v815 = vunpack.c.h.b16 %v410
        %v816 = vunpack.c.l.b16 %v411
        %v817 = vunpack.c.l.b16 %v412
        %v818 = vunpack.c.h.b16 %v412
        %v819 = vunpack.c.l.b16 %v413
        %v820 = vunpack.c.l.b16 %v414
        %v821 = vunpack.c.h.b16 %v414
        %v822 = vunpack.c.l.b16 %v415
        %v823 = vunpack.c.l.b16 %v416
        %v824 = vunpack.c.h.b16 %v416
        %v825 = vunpack.c.l.b16 %v417
        %v826 = vunpack.c.l.b16 %v418
        %v827 = vunpack.c.h.b16 %v418
        %v828 = vunpack.c.l.b16 %v419
        %v829 = vunpack.c.l.b16 %v420
        %v830 = vunpack.c.h.b16 %v420
        %v831 = vunpack.c.l.b16 %v421
        %v832 = vunpack.c.l.b16 %v422
        %v833 = vunpack.c.h.b16 %v422
        %v834 = vunpack.c.l.b16 %v423
        %v835 = vunpack.c.l.b16 %v424
        %v836 = vunpack.c.h.b16 %v424
        %v837 = vunpack.c.l.b16 %v425
        %v838 = vunpack.c.l.b16 %v426
        %v839 = vunpack.c.h.b16 %v426
        %v840 = vunpack.c.l.b16 %v427
        %v841 = vunpack.c.l.b16 %v428
        %v842 = vunpack.c.h.b16 %v428
        %v843 = vunpack.c.l.b16 %v429
        %v844 = vunpack.c.l.b16 %v430
        %v845 = vunpack.c.h.b16 %v430
        %v846 = vunpack.c.l.b16 %v431
        %v847 = vunpack.c.l.b16 %v432
        %v848 = vunpack.c.h.b16 %v432
        %v849 = vunpack.c.l.b16 %v433
        %v850 = vunpack.c.l.b16 %v434
        %v851 = vunpack.c.h.b16 %v434
        %v852 = vunpack.c.l.b16 %v435
        %v853 = vunpack.c.l.b16 %v436
        %v854 = vunpack.c.h.b16 %v436
        %v855 = vunpack.c.l.b16 %v437
        %v856 = vunpack.c.l.b16 %v438
        %v857 = vunpack.c.h.b16 %v438
        %v858 = vunpack.c.l.b16 %v439
        %v859 = vunpack.c.l.b16 %v440
        %v860 = vunpack.c.h.b16 %v440
        %v861 = vunpack.c.l.b16 %v441
        %v862 = vunpack.c.l.b16 %v442
        %v863 = vunpack.c.h.b16 %v442
        %v864 = vunpack.c.l.b16 %v443
        %v865 = vunpack.c.l.b16 %v444
        %v866 = vunpack.c.h.b16 %v444
        %v867 = vunpack.c.l.b16 %v445
        %v868 = vunpack.c.l.b16 %v446
        %v869 = vunpack.c.h.b16 %v446
        %v870 = vunpack.c.l.b16 %v447
        %v871 = vunpack.c.l.b16 %v448
        %v872 = vunpack.c.h.b16 %v448
        %v873 = vunpack.c.l.b16 %v449
        %v874 = vunpack.c.l.b16 %v450
        %v875 = vunpack.c.h.b16 %v450
        %v876 = vunpack.c.l.b16 %v451
        %v877 = vunpack.c.l.b16 %v452
        %v878 = vunpack.c.h.b16 %v452
        %v879 = vunpack.c.l.b16 %v453
        %v880 = vunpack.c.l.b16 %v454
        %v881 = vunpack.c.h.b16 %v454
        %v882 = vunpack.c.l.b16 %v455
        %v883 = vunpack.c.l.b16 %v456
        %v884 = vunpack.c.h.b16 %v456
        %v885 = vunpack.c.l.b16 %v457
        %v886 = vunpack.c.l.b16 %v458
        %v887 = vunpack.c.h.b16 %v458
        %v888 = vunpack.c.l.b16 %v459
        %v889 = vunpack.c.l.b16 %v460
        %v890 = vunpack.c.h.b16 %v460
        %v891 = vunpack.c.l.b16 %v461
        %v892 = vunpack.c.l.b16 %v462
        %v893 = vunpack.c.h.b16 %v462
        %v894 = vunpack.c.l.b16 %v463
        %v895 = vunpack.c.l.b16 %v464
        %v896 = vunpack.c.h.b16 %v464
        %v897 = vunpack.c.l.b16 %v465
        %v898 = vunpack.c.l.b16 %v466
        %v899 = vunpack.c.h.b16 %v466
        %v900 = vunpack.c.l.b16 %v467
        %v901 = vunpack.c.l.b16 %v468
        %v902 = vunpack.c.h.b16 %v468
        %v903 = vunpack.c.l.b16 %v469
        %v904 = vunpack.c.l.b16 %v470
        %v905 = vunpack.c.h.b16 %v470
        %v906 = vunpack.c.l.b16 %v471
        %v907 = vunpack.c.l.b16 %v472
        %v908 = vunpack.c.h.b16 %v472
        %v909 = vunpack.c.l.b16 %v473
        %v910 = vunpack.c.l.b16 %v474
        %v911 = vunpack.c.h.b16 %v474
        %v912 = vunpack.c.l.b16 %v475
        %v913 = vunpack.c.l.b16 %v476
        %v914 = vunpack.c.h.b16 %v476
        %v915 = vunpack.c.l.b16 %v477
        %v916 = vunpack.c.l.b16 %v478
        %v917 = vunpack.c.h.b16 %v478
        %v918 = vunpack.c.l.b16 %v479
        %v919 = vunpack.c.l.b16 %v480
        %v920 = vunpack.c.h.b16 %v480
        %v921 = vunpack.c.l.b16 %v481
        %v922 = vunpack.c.l.b16 %v482
        %v923 = vunpack.c.h.b16 %v482
        %v924 = vunpack.c.l.b16 %v483
        %v925 = vunpack.c.l.b16 %v484
        %v926 = vunpack.c.h.b16 %v484
        %v927 = vunpack.c.l.b16 %v485
        %v928 = vunpack.c.l.b16 %v486
        %v929 = vunpack.c.h.b16 %v486
        %v930 = vunpack.c.l.b16 %v487
        %v931 = vunpack.c.l.b16 %v488
        %v932 = vunpack.c.h.b16 %v488
        %v933 = vunpack.c.l.b16 %v489
        %v934 = vunpack.c.l.b16 %v490
        %v935 = vunpack.c.h.b16 %v490
        %v936 = vunpack.c.l.b16 %v491
        %v937 = vunpack.c.l.b16 %v492
        %v938 = vunpack.c.h.b16 %v492
        %v939 = vunpack.c.l.b16 %v493
        %v940 = vunpack.c.l.b16 %v494
        %v941 = vunpack.c.h.b16 %v494
        %v942 = vunpack.c.l.b16 %v495
        %v943 = vunpack.c.l.b16 %v496
        %v944 = vunpack.c.h.b16 %v496
        %v945 = vunpack.c.l.b16 %v497
        %v946 = vunpack.c.l.b16 %v498
        %v947 = vunpack.c.h.b16 %v498
        %v948 = vunpack.c.l.b16 %v499
        %v949 = vunpack.c.l.b16 %v500
        %v950 = vunpack.c.h.b16 %v500
        %v951 = vunpack.c.l.b16 %v501
        %v952 = vunpack.c.l.b16 %v502
        %v953 = vunpack.c.h.b16 %v502
        %v954 = vunpack.c.l.b16 %v503
        %v955 = vunpack.c.l.b16 %v504
        %v956 = vunpack.c.h.b16 %v504
        %v957 = vunpack.c.l.b16 %v505
        %v958 = vunpack.c.l.b16 %v506
        %v959 = vunpack.c.h.b16 %v506
        %v960 = vunpack.c.l.b16 %v507
        %v961 = vunpack.c.l.b16 %v508
        %v962 = vunpack.c.h.b16 %v508
        %v963 = vunpack.c.l.b16 %v509
        %v964 = vunpack.c.l.b16 %v510
        %v965 = vunpack.c.h.b16 %v510
        %v966 = vunpack.c.l.b16 %v511
        %v967 = vunpack.c.l.b16 %v512
        %v968 = vunpack.c.h.b16 %v512
        %v969 = vunpack.c.l.b16 %v513
        %v970 = vunpack.c.l.b16 %v514
        %v971 = vunpack.c.h.b16 %v514
        %v972 = vunpack.c.l.b16 %v515
        %v973 = vunpack.c.l.b16 %v516
        %v974 = vunpack.c.h.b16 %v516
        %v975 = vunpack.c.l.b16 %v517
        %v976 = vunpack.c.l.b16 %v518
        %v977 = vunpack.c.h.b16 %v518
        %v978 = vunpack.c.l.b16 %v519
        %v979 = vunpack.c.l.b16 %v520
        %v980 = vunpack.c.h.b16 %v520
        %v981 = vunpack.c.l.b16 %v521
        %v982 = vunpack.c.l.b16 %v522
        %v983 = vunpack.c.h.b16 %v522
        %v984 = vunpack.c.l.b16 %v523
        %v985 = vunpack.c.l.b16 %v524
        %v986 = vunpack.c.h.b16 %v524
        %v987 = vunpack.c.l.b16 %v525
        %v988 = vunpack.c.l.b16 %v526
        %v989 = vunpack.c.h.b16 %v526
        %v990 = vunpack.c.l.b16 %v527
        %v991 = vunpack.c.l.b16 %v528
        %v992 = vunpack.c.h.b16 %v528
        %v993 = vunpack.c.l.b16 %v529
        %v994 = vunpack.c.l.b16 %v530
        %v995 = vunpack.c.h.b16 %v530
        %v996 = vunpack.c.l.b16 %v531
        %v997 = vunpack.c.l.b16 %v532
        %v998 = vunpack.c.h.b16 %v532
        %v999 = vunpack.c.l.b16 %v533
        %v1000 = vunpack.c.l.b16 %v534
        %v1001 = vunpack.c.h.b16 %v534
        %v1002 = vunpack.c.l.b16 %v535
        %v1003 = vunpack.c.l.b16 %v536
        %v1004 = vunpack.c.h.b16 %v536
        %v1005 = vunpack.c.l.b16 %v537
        %v1006 = vunpack.c.l.b16 %v538
        %v1007 = vunpack.c.h.b16 %v538
        %v1008 = vunpack.c.l.b16 %v539
        %v1009 = vunpack.c.l.b16 %v540
        %v1010 = vunpack.c.h.b16 %v540
        %v1011 = vunpack.c.l.b16 %v541
        %v1012 = vunpack.c.l.b16 %v542
        %v1013 = vunpack.c.h.b16 %v542
        %v1014 = vunpack.c.l.b16 %v543
        %v1015 = vunpack.c.l.b16 %v544
        %v1016 = vunpack.c.h.b16 %v544
        %v1017 = vunpack.c.l.b16 %v545
        %v1018 = vunpack.c.l.b16 %v546
        %v1019 = vunpack.c.h.b16 %v546
        %v1020 = vunpack.c.l.b16 %v547
        %v1021 = vunpack.c.l.b16 %v548
        %v1022 = vunpack.c.h.b16 %v548
        %v1023 = vunpack.c.l.b16 %v549
        %v1024 = vunpack.c.l.b16 %v550
        %v1025 = vunpack.c.h.b16 %v550
        %v1026 = vunpack.c.l.b16 %v551
        %v1027 = vunpack.c.l.b16 %v552
        %v1028 = vunpack.c.h.b16 %v552
        %v1029 = vunpack.c.l.b16 %v553
        %v1030 = vunpack.c.l.b16 %v554
        %v1031 = vunpack.c.h.b16 %v554
        %v1032 = vunpack.c.l.b16 %v555
        %v1033 = vunpack.c.l.b16 %v556
        %v1034 = vunpack.c.h.b16 %v556
        %v1035 = vunpack.c.l.b16 %v557
        %v1036 = vunpack.c.l.b16 %v558
        %v1037 = vunpack.c.h.b16 %v558
        %v1038 = vunpack.c.l.b16 %v559
        %v1039 = vunpack.c.l.b16 %v560
        %v1040 = vunpack.c.h.b16 %v560
        %v1041 = vunpack.c.l.b16 %v561
        %v1042 = vpack.c.b16 %v757, %v754
        %v1043 = vpack.c.b16 %v758, %v755
        %v1044 = vpack.c.b16 %v759, %v756
        %v1045 = vpack.c.b16 %v763, %v760
        %v1046 = vpack.c.b16 %v764, %v761
        %v1047 = vpack.c.b16 %v765, %v762
        %v1048 = vpack.c.b16 %v769, %v766
        %v1049 = vpack.c.b16 %v770, %v767
        %v1050 = vpack.c.b16 %v771, %v768
        %v1051 = vpack.c.b16 %v775, %v772
        %v1052 = vpack.c.b16 %v776, %v773
        %v1053 = vpack.c.b16 %v777, %v774
        %v1054 = vpack.c.b16 %v781, %v778
        %v1055 = vpack.c.b16 %v782, %v779
        %v1056 = vpack.c.b16 %v783, %v780
        %v1057 = vpack.c.b16 %v787, %v784
        %v1058 = vpack.c.b16 %v788, %v785
        %v1059 = vpack.c.b16 %v789, %v786
        %v1060 = vpack.c.b16 %v793, %v790
        %v1061 = vpack.c.b16 %v794, %v791
        %v1062 = vpack.c.b16 %v795, %v792
        %v1063 = vpack.c.b16 %v799, %v796
        %v1064 = vpack.c.b16 %v800, %v797
        %v1065 = vpack.c.b16 %v801, %v798
        %v1066 = vpack.c.b16 %v805, %v802
        %v1067 = vpack.c.b16 %v806, %v803
        %v1068 = vpack.c.b16 %v807, %v804
        %v1069 = vpack.c.b16 %v811, %v808
        %v1070 = vpack.c.b16 %v812, %v809
        %v1071 = vpack.c.b16 %v813, %v810
        %v1072 = vpack.c.b16 %v817, %v814
        %v1073 = vpack.c.b16 %v818, %v815
        %v1074 = vpack.c.b16 %v819, %v816
        %v1075 = vpack.c.b16 %v823, %v820
        %v1076 = vpack.c.b16 %v824, %v821
        %v1077 = vpack.c.b16 %v825, %v822
        %v1078 = vpack.c.b16 %v829, %v826
        %v1079 = vpack.c.b16 %v830, %v827
        %v1080 = vpack.c.b16 %v831, %v828
        %v1081 = vpack.c.b16 %v835, %v832
        %v1082 = vpack.c.b16 %v836, %v833
        %v1083 = vpack.c.b16 %v837, %v834
        %v1084 = vpack.c.b16 %v841, %v838
        %v1085 = vpack.c.b16 %v842, %v839
        %v1086 = vpack.c.b16 %v843, %v840
        %v1087 = vpack.c.b16 %v847, %v844
        %v1088 = vpack.c.b16 %v848, %v845
        %v1089 = vpack.c.b16 %v849, %v846
        %v1090 = vpack.c.b16 %v853, %v850
        %v1091 = vpack.c.b16 %v854, %v851
        %v1092 = vpack.c.b16 %v855, %v852
        %v1093 = vpack.c.b16 %v859, %v856
        %v1094 = vpack.c.b16 %v860, %v857
        %v1095 = vpack.c.b16 %v861, %v858
        %v1096 = vpack.c.b16 %v865, %v862
        %v1097 = vpack.c.b16 %v866, %v863
        %v1098 = vpack.c.b16 %v867, %v864
        %v1099 = vpack.c.b16 %v871, %v868
        %v1100 = vpack.c.b16 %v872, %v869
        %v1101 = vpack.c.b16 %v873, %v870
        %v1102 = vpack.c.b16 %v877, %v874
        %v1103 = vpack.c.b16 %v878, %v875
        %v1104 = vpack.c.b16 %v879, %v876
        %v1105 = vpack.c.b16 %v883, %v880
        %v1106 = vpack.c.b16 %v884, %v881
        %v1107 = vpack.c.b16 %v885, %v882
        %v1108 = vpack.c.b16 %v889, %v886
        %v1109 = vpack.c.b16 %v890, %v887
        %v1110 = vpack.c.b16 %v891, %v888
        %v1111 = vpack.c.b16 %v895, %v892
        %v1112 = vpack.c.b16 %v896, %v893
        %v1113 = vpack.c.b16 %v897, %v894
        %v1114 = vpack.c.b16 %v901, %v898
        %v1115 = vpack.c.b16 %v902, %v899
        %v1116 = vpack.c.b16 %v903, %v900
        %v1117 = vpack.c.b16 %v907, %v904
        %v1118 = vpack.c.b16 %v908, %v905
        %v1119 = vpack.c.b16 %v909, %v906
        %v1120 = vpack.c.b16 %v913, %v910
        %v1121 = vpack.c.b16 %v914, %v911
        %v1122 = vpack.c.b16 %v915, %v912
        %v1123 = vpack.c.b16 %v919, %v916
        %v1124 = vpack.c.b16 %v920, %v917
        %v1125 = vpack.c.b16 %v921, %v918
        %v1126 = vpack.c.b16 %v925, %v922
        %v1127 = vpack.c.b16 %v926, %v923
        %v1128 = vpack.c.b16 %v927, %v924
        %v1129 = vpack.c.b16 %v931, %v928
        %v1130 = vpack.c.b16 %v932, %v929
        %v1131 = vpack.c.b16 %v933, %v930
        %v1132 = vpack.c.b16 %v937, %v934
        %v1133 = vpack.c.b16 %v938, %v935
        %v1134 = vpack.c.b16 %v939, %v936
        %v1135 = vpack.c.b16 %v943, %v940
        %v1136 = vpack.c.b16 %v944, %v941
        %v1137 = vpack.c.b16 %v945, %v942
        %v1138 = vpack.c.b16 %v949, %v946
        %v1139 = vpack.c.b16 %v950, %v947
        %v1140 = vpack.c.b16 %v951, %v948
        %v1141 = vpack.c.b16 %v955, %v952
        %v1142 = vpack.c.b16 %v956, %v953
        %v1143 = vpack.c.b16 %v957, %v954
        %v1144 = vpack.c.b16 %v961, %v958
        %v1145 = vpack.c.b16 %v962, %v959
        %v1146 = vpack.c.b16 %v963, %v960
        %v1147 = vpack.c.b16 %v967, %v964
        %v1148 = vpack.c.b16 %v968, %v965
        %v1149 = vpack.c.b16 %v969, %v966
        %v1150 = vpack.c.b16 %v973, %v970
        %v1151 = vpack.c.b16 %v974, %v971
        %v1152 = vpack.c.b16 %v975, %v972
        %v1153 = vpack.c.b16 %v979, %v976
        %v1154 = vpack.c.b16 %v980, %v977
        %v1155 = vpack.c.b16 %v981, %v978
        %v1156 = vpack.c.b16 %v985, %v982
        %v1157 = vpack.c.b16 %v986, %v983
        %v1158 = vpack.c.b16 %v987, %v984
        %v1159 = vpack.c.b16 %v991, %v988
        %v1160 = vpack.c.b16 %v992, %v989
        %v1161 = vpack.c.b16 %v993, %v990
        %v1162 = vpack.c.b16 %v997, %v994
        %v1163 = vpack.c.b16 %v998, %v995
        %v1164 = vpack.c.b16 %v999, %v996
        %v1165 = vpack.c.b16 %v1003, %v1000
        %v1166 = vpack.c.b16 %v1004, %v1001
        %v1167 = vpack.c.b16 %v1005, %v1002
        %v1168 = vpack.c.b16 %v1009, %v1006
        %v1169 = vpack.c.b16 %v1010, %v1007
        %v1170 = vpack.c.b16 %v1011, %v1008
        %v1171 = vpack.c.b16 %v1015, %v1012
        %v1172 = vpack.c.b16 %v1016, %v1013
        %v1173 = vpack.c.b16 %v1017, %v1014
        %v1174 = vpack.c.b16 %v1021, %v1018
        %v1175 = vpack.c.b16 %v1022, %v1019
        %v1176 = vpack.c.b16 %v1023, %v1020
        %v1177 = vpack.c.b16 %v1027, %v1024
        %v1178 = vpack.c.b16 %v1028, %v1025
        %v1179 = vpack.c.b16 %v1029, %v1026
        %v1180 = vpack.c.b16 %v1033, %v1030
        %v1181 = vpack.c.b16 %v1034, %v1031
        %v1182 = vpack.c.b16 %v1035, %v1032
        %v1183 = vpack.c.b16 %v1039, %v1036
        %v1184 = vpack.c.b16 %v1040, %v1037
        %v1185 = vpack.c.b16 %v1041, %v1038
        %1330 = vmatprep.subr.bf16.mxu0 %v1064
        %1331 = vmatpush1.bf16.msra.mxu0 %v1063
        %1332 = vmatprep.subr.bf16.mxu0 %v1061
        %1333 = vmatpush1.bf16.msra.mxu0 %v1060
        %1334 = vmatprep.subr.bf16.mxu0 %v1058
        %1335 = vmatpush1.bf16.msra.mxu0 %v1057
        %1336 = vmatprep.subr.bf16.mxu0 %v1055
        %1337 = vmatpush1.bf16.msra.mxu0 %v1054
        %1338 = vmatprep.subr.bf16.mxu0 %v1052
        %1339 = vmatpush1.bf16.msra.mxu0 %v1051
        %1340 = vmatprep.subr.bf16.mxu0 %v1049
        %1341 = vmatpush1.bf16.msra.mxu0 %v1048
        %1342 = vmatprep.subr.bf16.mxu0 %v1046
        %1343 = vmatpush1.bf16.msra.mxu0 %v1045
        %1344 = vmatprep.subr.bf16.mxu0 %v1043
        %1345 = vmatpush1.bf16.msra.mxu0 %v1042
        %1346 = vmatprep.subr.bf16.mxu0 %v1088
        %1347 = vmatpush2.bf16.msra.mxu0 %v1087
        %1348 = vmatprep.subr.bf16.mxu0 %v1085
        %1349 = vmatpush2.bf16.msra.mxu0 %v1084
        %1350 = vmatprep.subr.bf16.mxu0 %v1082
        %1351 = vmatpush2.bf16.msra.mxu0 %v1081
        %1352 = vmatprep.subr.bf16.mxu0 %v1079
        %1353 = vmatpush2.bf16.msra.mxu0 %v1078
        %1354 = vmatprep.subr.bf16.mxu0 %v1076
        %1355 = vmatpush2.bf16.msra.mxu0 %v1075
        %1356 = vmatprep.subr.bf16.mxu0 %v1073
        %1357 = vmatpush2.bf16.msra.mxu0 %v1072
        %1358 = vmatprep.subr.bf16.mxu0 %v1070
        %1359 = vmatpush2.bf16.msra.mxu0 %v1069
        %1360 = vmatprep.subr.bf16.mxu0 %v1067
        %1361 = vmatpush2.bf16.msra.mxu0 %v1066
        %1362 = vmatprep.mubr.bf16.mxu0 %v365
        %1363 = vmatmul.mubr.bf16.gmra.mxu0 %v364
        %v1364 = vpop.f32.mrf.mxu0
        %v1365 = vadd.f32 0.0, %v1364
        %v1366 = vpop.f32.mrf.mxu0
        %v1367 = vadd.f32 0.0, %v1366
        %v1368 = vpop.f32.mrf.mxu0
        %v1369 = vpop.f32.mrf.mxu0
        %1370 = vdwg.mxu0
        %1371 = vmatprep.subr.bf16.mxu0 %v1112
        %1372 = vmatpush1.bf16.msra.mxu0 %v1111
        %1373 = vmatprep.subr.bf16.mxu0 %v1109
        %1374 = vmatpush1.bf16.msra.mxu0 %v1108
        %1375 = vmatprep.subr.bf16.mxu0 %v1106
        %1376 = vmatpush1.bf16.msra.mxu0 %v1105
        %1377 = vmatprep.subr.bf16.mxu0 %v1103
        %1378 = vmatpush1.bf16.msra.mxu0 %v1102
        %1379 = vmatprep.subr.bf16.mxu0 %v1100
        %1380 = vmatpush1.bf16.msra.mxu0 %v1099
        %1381 = vmatprep.subr.bf16.mxu0 %v1097
        %1382 = vmatpush1.bf16.msra.mxu0 %v1096
        %1383 = vmatprep.subr.bf16.mxu0 %v1094
        %1384 = vmatpush1.bf16.msra.mxu0 %v1093
        %1385 = vmatprep.subr.bf16.mxu0 %v1091
        %1386 = vmatpush1.bf16.msra.mxu0 %v1090
        %1387 = vmatprep.subr.bf16.mxu0 %v1136
        %1388 = vmatpush2.bf16.msra.mxu0 %v1135
        %1389 = vmatprep.subr.bf16.mxu0 %v1133
        %1390 = vmatpush2.bf16.msra.mxu0 %v1132
        %1391 = vmatprep.subr.bf16.mxu0 %v1130
        %1392 = vmatpush2.bf16.msra.mxu0 %v1129
        %1393 = vmatprep.subr.bf16.mxu0 %v1127
        %1394 = vmatpush2.bf16.msra.mxu0 %v1126
        %1395 = vmatprep.subr.bf16.mxu0 %v1124
        %1396 = vmatpush2.bf16.msra.mxu0 %v1123
        %1397 = vmatprep.subr.bf16.mxu0 %v1121
        %1398 = vmatpush2.bf16.msra.mxu0 %v1120
        %1399 = vmatprep.subr.bf16.mxu0 %v1118
        %1400 = vmatpush2.bf16.msra.mxu0 %v1117
        %1401 = vmatprep.subr.bf16.mxu0 %v1115
        %1402 = vmatpush2.bf16.msra.mxu0 %v1114
        %1403 = vmatprep.mubr.bf16.mxu0 %v367
        %1404 = vmatmul.mubr.bf16.gmra.mxu0 %v366
        %v1405 = vpop.f32.mrf.mxu0
        %v1406 = vadd.f32 %v1365, %v1405
        %v1407 = vpop.f32.mrf.mxu0
        %v1408 = vadd.f32 %v1367, %v1407
        %v1409 = vpop.f32.mrf.mxu0
        %v1410 = vpop.f32.mrf.mxu0
        %1411 = vdwg.mxu0
        %1412 = vmatprep.subr.bf16.mxu0 %v1160
        %1413 = vmatpush1.bf16.msra.mxu0 %v1159
        %1414 = vmatprep.subr.bf16.mxu0 %v1157
        %1415 = vmatpush1.bf16.msra.mxu0 %v1156
        %1416 = vmatprep.subr.bf16.mxu0 %v1154
        %1417 = vmatpush1.bf16.msra.mxu0 %v1153
        %1418 = vmatprep.subr.bf16.mxu0 %v1151
        %1419 = vmatpush1.bf16.msra.mxu0 %v1150
        %1420 = vmatprep.subr.bf16.mxu0 %v1148
        %1421 = vmatpush1.bf16.msra.mxu0 %v1147
        %1422 = vmatprep.subr.bf16.mxu0 %v1145
        %1423 = vmatpush1.bf16.msra.mxu0 %v1144
        %1424 = vmatprep.subr.bf16.mxu0 %v1142
        %1425 = vmatpush1.bf16.msra.mxu0 %v1141
        %1426 = vmatprep.subr.bf16.mxu0 %v1139
        %1427 = vmatpush1.bf16.msra.mxu0 %v1138
        %1428 = vmatprep.subr.bf16.mxu0 %v1184
        %1429 = vmatpush2.bf16.msra.mxu0 %v1183
        %1430 = vmatprep.subr.bf16.mxu0 %v1181
        %1431 = vmatpush2.bf16.msra.mxu0 %v1180
        %1432 = vmatprep.subr.bf16.mxu0 %v1178
        %1433 = vmatpush2.bf16.msra.mxu0 %v1177
        %1434 = vmatprep.subr.bf16.mxu0 %v1175
        %1435 = vmatpush2.bf16.msra.mxu0 %v1174
        %1436 = vmatprep.subr.bf16.mxu0 %v1172
        %1437 = vmatpush2.bf16.msra.mxu0 %v1171
        %1438 = vmatprep.subr.bf16.mxu0 %v1169
        %1439 = vmatpush2.bf16.msra.mxu0 %v1168
        %1440 = vmatprep.subr.bf16.mxu0 %v1166
        %1441 = vmatpush2.bf16.msra.mxu0 %v1165
        %1442 = vmatprep.subr.bf16.mxu0 %v1163
        %1443 = vmatpush2.bf16.msra.mxu0 %v1162
        %1444 = vmatprep.mubr.bf16.mxu0 %v369
        %1445 = vmatmul.mubr.bf16.gmra.mxu0 %v368
        %v1446 = vpop.f32.mrf.mxu0
        %v1447 = vadd.f32 %v1406, %v1446
        %v1448 = vpop.f32.mrf.mxu0
        %v1449 = vadd.f32 %v1408, %v1448
        %v1450 = vpop.f32.mrf.mxu0
        %v1451 = vpop.f32.mrf.mxu0
        %1452 = vdwg.mxu0
        %1453 = vmatprep.subr.bf16.mxu0 0
        %1454 = vmatpush1.bf16.msra.mxu0 %v1065
        %1455 = vmatprep.subr.bf16.mxu0 0
        %1456 = vmatpush1.bf16.msra.mxu0 %v1062
        %1457 = vmatprep.subr.bf16.mxu0 0
        %1458 = vmatpush1.bf16.msra.mxu0 %v1059
        %1459 = vmatprep.subr.bf16.mxu0 0
        %1460 = vmatpush1.bf16.msra.mxu0 %v1056
        %1461 = vmatprep.subr.bf16.mxu0 0
        %1462 = vmatpush1.bf16.msra.mxu0 %v1053
        %1463 = vmatprep.subr.bf16.mxu0 0
        %1464 = vmatpush1.bf16.msra.mxu0 %v1050
        %1465 = vmatprep.subr.bf16.mxu0 0
        %1466 = vmatpush1.bf16.msra.mxu0 %v1047
        %1467 = vmatprep.subr.bf16.mxu0 0
        %1468 = vmatpush1.bf16.msra.mxu0 %v1044
        %1469 = vmatprep.subr.bf16.mxu0 0
        %1470 = vmatpush2.bf16.msra.mxu0 %v1089
        %1471 = vmatprep.subr.bf16.mxu0 0
        %1472 = vmatpush2.bf16.msra.mxu0 %v1086
        %1473 = vmatprep.subr.bf16.mxu0 0
        %1474 = vmatpush2.bf16.msra.mxu0 %v1083
        %1475 = vmatprep.subr.bf16.mxu0 0
        %1476 = vmatpush2.bf16.msra.mxu0 %v1080
        %1477 = vmatprep.subr.bf16.mxu0 0
        %1478 = vmatpush2.bf16.msra.mxu0 %v1077
        %1479 = vmatprep.subr.bf16.mxu0 0
        %1480 = vmatpush2.bf16.msra.mxu0 %v1074
        %1481 = vmatprep.subr.bf16.mxu0 0
        %1482 = vmatpush2.bf16.msra.mxu0 %v1071
        %1483 = vmatprep.subr.bf16.mxu0 0
        %1484 = vmatpush2.bf16.msra.mxu0 %v1068
        %1485 = vmatprep.mubr.bf16.mxu0 %v365
        %1486 = vmatmul.mubr.bf16.gmra.mxu0 %v364
        %v1487 = vpop.f32.mrf.mxu0
        %v1488 = vadd.f32 0.0, %v1487
        %v1489 = vpop.f32.mrf.mxu0
        %v1490 = vpop.f32.mrf.mxu0
        %v1491 = vpop.f32.mrf.mxu0
        %1492 = vdwg.mxu0
        %1493 = vmatprep.subr.bf16.mxu0 0
        %1494 = vmatpush1.bf16.msra.mxu0 %v1113
        %1495 = vmatprep.subr.bf16.mxu0 0
        %1496 = vmatpush1.bf16.msra.mxu0 %v1110
        %1497 = vmatprep.subr.bf16.mxu0 0
        %1498 = vmatpush1.bf16.msra.mxu0 %v1107
        %1499 = vmatprep.subr.bf16.mxu0 0
        %1500 = vmatpush1.bf16.msra.mxu0 %v1104
        %1501 = vmatprep.subr.bf16.mxu0 0
        %1502 = vmatpush1.bf16.msra.mxu0 %v1101
        %1503 = vmatprep.subr.bf16.mxu0 0
        %1504 = vmatpush1.bf16.msra.mxu0 %v1098
        %1505 = vmatprep.subr.bf16.mxu0 0
        %1506 = vmatpush1.bf16.msra.mxu0 %v1095
        %1507 = vmatprep.subr.bf16.mxu0 0
        %1508 = vmatpush1.bf16.msra.mxu0 %v1092
        %1509 = vmatprep.subr.bf16.mxu0 0
        %1510 = vmatpush2.bf16.msra.mxu0 %v1137
        %1511 = vmatprep.subr.bf16.mxu0 0
        %1512 = vmatpush2.bf16.msra.mxu0 %v1134
        %1513 = vmatprep.subr.bf16.mxu0 0
        %1514 = vmatpush2.bf16.msra.mxu0 %v1131
        %1515 = vmatprep.subr.bf16.mxu0 0
        %1516 = vmatpush2.bf16.msra.mxu0 %v1128
        %1517 = vmatprep.subr.bf16.mxu0 0
        %1518 = vmatpush2.bf16.msra.mxu0 %v1125
        %1519 = vmatprep.subr.bf16.mxu0 0
        %1520 = vmatpush2.bf16.msra.mxu0 %v1122
        %1521 = vmatprep.subr.bf16.mxu0 0
        %1522 = vmatpush2.bf16.msra.mxu0 %v1119
        %1523 = vmatprep.subr.bf16.mxu0 0
        %1524 = vmatpush2.bf16.msra.mxu0 %v1116
        %1525 = vmatprep.mubr.bf16.mxu0 %v367
        %1526 = vmatmul.mubr.bf16.gmra.mxu0 %v366
        %v1527 = vpop.f32.mrf.mxu0
        %v1528 = vadd.f32 %v1488, %v1527
        %v1529 = vpop.f32.mrf.mxu0
        %v1530 = vpop.f32.mrf.mxu0
        %v1531 = vpop.f32.mrf.mxu0
        %1532 = vdwg.mxu0
        %1533 = vmatprep.subr.bf16.mxu0 0
        %1534 = vmatpush1.bf16.msra.mxu0 %v1161
        %1535 = vmatprep.subr.bf16.mxu0 0
        %1536 = vmatpush1.bf16.msra.mxu0 %v1158
        %1537 = vmatprep.subr.bf16.mxu0 0
        %1538 = vmatpush1.bf16.msra.mxu0 %v1155
        %1539 = vmatprep.subr.bf16.mxu0 0
        %1540 = vmatpush1.bf16.msra.mxu0 %v1152
        %1541 = vmatprep.subr.bf16.mxu0 0
        %1542 = vmatpush1.bf16.msra.mxu0 %v1149
        %1543 = vmatprep.subr.bf16.mxu0 0
        %1544 = vmatpush1.bf16.msra.mxu0 %v1146
        %1545 = vmatprep.subr.bf16.mxu0 0
        %1546 = vmatpush1.bf16.msra.mxu0 %v1143
        %1547 = vmatprep.subr.bf16.mxu0 0
        %1548 = vmatpush1.bf16.msra.mxu0 %v1140
        %1549 = vmatprep.subr.bf16.mxu0 0
        %1550 = vmatpush2.bf16.msra.mxu0 %v1185
        %1551 = vmatprep.subr.bf16.mxu0 0
        %1552 = vmatpush2.bf16.msra.mxu0 %v1182
        %1553 = vmatprep.subr.bf16.mxu0 0
        %1554 = vmatpush2.bf16.msra.mxu0 %v1179
        %1555 = vmatprep.subr.bf16.mxu0 0
        %1556 = vmatpush2.bf16.msra.mxu0 %v1176
        %1557 = vmatprep.subr.bf16.mxu0 0
        %1558 = vmatpush2.bf16.msra.mxu0 %v1173
        %1559 = vmatprep.subr.bf16.mxu0 0
        %1560 = vmatpush2.bf16.msra.mxu0 %v1170
        %1561 = vmatprep.subr.bf16.mxu0 0
        %1562 = vmatpush2.bf16.msra.mxu0 %v1167
        %1563 = vmatprep.subr.bf16.mxu0 0
        %1564 = vmatpush2.bf16.msra.mxu0 %v1164
        %1565 = vmatprep.mubr.bf16.mxu0 %v369
        %1566 = vmatmul.mubr.bf16.gmra.mxu0 %v368
        %v1567 = vpop.f32.mrf.mxu0
        %v1568 = vadd.f32 %v1528, %v1567
        %v1569 = vpop.f32.mrf.mxu0
        %v1570 = vpop.f32.mrf.mxu0
        %v1571 = vpop.f32.mrf.mxu0
        %1572 = vdwg.mxu0
        %v1576 = vcombine.low %v1447, %v1449
        %v1578 = vunpack.c.l.s4 1983009808
        %v1579 = vunpack.c.0.s8 %v1578
        %v1580 = vlaneseq
        %v1581 = vshrl.u32 %v1580, 7
        %v1582 = vsub.s32 %v1579, %v1581
        %v1583 = vrot.slane %v1576, %v1582
        %v1585 = vunpack.c.l.s4 1983009808
        %v1586 = vunpack.c.0.s8 %v1585
        %v1587 = vlaneseq
        %v1588 = vshrl.u32 %v1587, 7
        %v1589 = vsub.s32 %v1586, %v1588
        %v1590 = vrot.slane %v1568, %v1589
        %v1591 = vcombine.low %v1583, %v1590
        %v1593 = vadd.f32 %v328, %v1591
        %1594 = vst [vmem:[%s327] sm:$0x3f] %v1593
        %p1595 = scmp.eq.s32.totalorder %s28, 1
        %p1596 = pnand %p1595, %p317
        %p1597 = pneg %p1596
        // Predicated region
        $region61: #{tpu_custom_call.1} parent=39 // pred_check
          _
        $region62: #{tpu_custom_call.1} parent=39 // pred_check_branch
          %1599 = sbr.rel (%p1596) target = $region64
        $region63: #{tpu_custom_call.1} parent=39 // pred_region
          %v1600 = vld [vmem:[#allocation2] sm:$0x3f]
          %v1602 = vcombine.high %v1600, %v1600
          %v1604 = vunpack.c.l.s4 1983009808
          %v1605 = vunpack.c.0.s8 %v1604
          %v1606 = vlaneseq
          %v1607 = vshrl.u32 %v1606, 7
          %v1608 = vsub.s32 %v1605, %v1607
          %v1609 = vrot.slane %v1600, %v1608
          %v1611 = vunpack.c.l.s4 1983009808
          %v1612 = vunpack.c.0.s8 %v1611
          %v1613 = vlaneseq
          %v1614 = vshrl.u32 %v1613, 7
          %v1615 = vsub.s32 %v1612, %v1614
          %v1616 = vrot.slane %v1602, %v1615
          %v1617 = vcombine.high %v1609, %v1609
          %v1621 = vpack.c.bf16 %v1609, %v1609
          %v1622 = vpack.c.bf16 %v1617, %v1617
          %v1623 = vpack.c.bf16 %v1616, %v1616
          %s1624 = scalar_lea.vmem [#allocation2], 6
          %v1625 = vld [vmem:[%s1624] sm:$0x3f]
          %v1627 = vcombine.high %v1625, %v1625
          %v1629 = vunpack.c.l.s4 1983009808
          %v1630 = vunpack.c.0.s8 %v1629
          %v1631 = vlaneseq
          %v1632 = vshrl.u32 %v1631, 7
          %v1633 = vsub.s32 %v1630, %v1632
          %v1634 = vrot.slane %v1625, %v1633
          %v1636 = vunpack.c.l.s4 1983009808
          %v1637 = vunpack.c.0.s8 %v1636
          %v1638 = vlaneseq
          %v1639 = vshrl.u32 %v1638, 7
          %v1640 = vsub.s32 %v1637, %v1639
          %v1641 = vrot.slane %v1627, %v1640
          %v1642 = vcombine.high %v1634, %v1634
          %v1646 = vpack.c.bf16 %v1634, %v1634
          %v1647 = vpack.c.bf16 %v1642, %v1642
          %v1648 = vpack.c.bf16 %v1641, %v1641
          %v1649 = vld [vmem:[#allocation8] sm:$0xf]
          %v1650 = vld [vmem:[#allocation8 + $0x4] sm:$0xf]
          %v1651 = vld [vmem:[#allocation8 + $0x8] sm:$0xf]
          %v1652 = vld [vmem:[#allocation8 + $0xc] sm:$0xf]
          %v1653 = vld [vmem:[#allocation8 + $0x10] sm:$0xf]
          %v1654 = vld [vmem:[#allocation8 + $0x14] sm:$0xf]
          %v1655 = vld [vmem:[#allocation8 + $0x18] sm:$0xf]
          %v1656 = vld [vmem:[#allocation8 + $0x1c] sm:$0xf]
          %v1657 = vld [vmem:[#allocation8 + $0x20] sm:$0xf]
          %v1658 = vld [vmem:[#allocation8 + $0x24] sm:$0xf]
          %v1659 = vld [vmem:[#allocation8 + $0x28] sm:$0xf]
          %v1660 = vld [vmem:[#allocation8 + $0x2c] sm:$0xf]
          %v1661 = vld [vmem:[#allocation8 + $0x30] sm:$0xf]
          %v1662 = vld [vmem:[#allocation8 + $0x34] sm:$0xf]
          %v1663 = vld [vmem:[#allocation8 + $0x38] sm:$0xf]
          %v1664 = vld [vmem:[#allocation8 + $0x3c] sm:$0xf]
          %v1665 = vld [vmem:[#allocation8 + $0x40] sm:$0xf]
          %v1666 = vld [vmem:[#allocation8 + $0x44] sm:$0xf]
          %v1667 = vld [vmem:[#allocation8 + $0x48] sm:$0xf]
          %v1668 = vld [vmem:[#allocation8 + $0x4c] sm:$0xf]
          %v1669 = vld [vmem:[#allocation8 + $0x50] sm:$0xf]
          %v1670 = vld [vmem:[#allocation8 + $0x54] sm:$0xf]
          %v1671 = vld [vmem:[#allocation8 + $0x58] sm:$0xf]
          %v1672 = vld [vmem:[#allocation8 + $0x5c] sm:$0xf]
          %v1673 = vld [vmem:[#allocation8 + $0x60] sm:$0xf]
          %v1674 = vld [vmem:[#allocation8 + $0x64] sm:$0xf]
          %v1675 = vld [vmem:[#allocation8 + $0x68] sm:$0xf]
          %v1676 = vld [vmem:[#allocation8 + $0x6c] sm:$0xf]
          %v1677 = vld [vmem:[#allocation8 + $0x70] sm:$0xf]
          %v1678 = vld [vmem:[#allocation8 + $0x74] sm:$0xf]
          %v1679 = vld [vmem:[#allocation8 + $0x78] sm:$0xf]
          %v1680 = vld [vmem:[#allocation8 + $0x7c] sm:$0xf]
          %v1681 = vld [vmem:[#allocation8 + $0x80] sm:$0xf]
          %v1682 = vld [vmem:[#allocation8 + $0x84] sm:$0xf]
          %v1683 = vld [vmem:[#allocation8 + $0x88] sm:$0xf]
          %v1684 = vld [vmem:[#allocation8 + $0x8c] sm:$0xf]
          %v1685 = vld [vmem:[#allocation8 + $0x90] sm:$0xf]
          %v1686 = vld [vmem:[#allocation8 + $0x94] sm:$0xf]
          %v1687 = vld [vmem:[#allocation8 + $0x98] sm:$0xf]
          %v1688 = vld [vmem:[#allocation8 + $0x9c] sm:$0xf]
          %v1689 = vld [vmem:[#allocation8 + $0xa0] sm:$0xf]
          %v1690 = vld [vmem:[#allocation8 + $0xa4] sm:$0xf]
          %v1691 = vld [vmem:[#allocation8 + $0xa8] sm:$0xf]
          %v1692 = vld [vmem:[#allocation8 + $0xac] sm:$0xf]
          %v1693 = vld [vmem:[#allocation8 + $0xb0] sm:$0xf]
          %v1694 = vld [vmem:[#allocation8 + $0xb4] sm:$0xf]
          %v1695 = vld [vmem:[#allocation8 + $0xb8] sm:$0xf]
          %v1696 = vld [vmem:[#allocation8 + $0xbc] sm:$0xf]
          %v1697 = vld [vmem:[#allocation9] sm:$0xf]
          %v1698 = vld [vmem:[#allocation9 + $0x4] sm:$0xf]
          %v1699 = vld [vmem:[#allocation9 + $0x8] sm:$0xf]
          %v1700 = vld [vmem:[#allocation9 + $0xc] sm:$0xf]
          %v1701 = vld [vmem:[#allocation9 + $0x10] sm:$0xf]
          %v1702 = vld [vmem:[#allocation9 + $0x14] sm:$0xf]
          %v1703 = vld [vmem:[#allocation9 + $0x18] sm:$0xf]
          %v1704 = vld [vmem:[#allocation9 + $0x1c] sm:$0xf]
          %v1705 = vld [vmem:[#allocation9 + $0x20] sm:$0xf]
          %v1706 = vld [vmem:[#allocation9 + $0x24] sm:$0xf]
          %v1707 = vld [vmem:[#allocation9 + $0x28] sm:$0xf]
          %v1708 = vld [vmem:[#allocation9 + $0x2c] sm:$0xf]
          %v1709 = vld [vmem:[#allocation9 + $0x30] sm:$0xf]
          %v1710 = vld [vmem:[#allocation9 + $0x34] sm:$0xf]
          %v1711 = vld [vmem:[#allocation9 + $0x38] sm:$0xf]
          %v1712 = vld [vmem:[#allocation9 + $0x3c] sm:$0xf]
          %v1713 = vld [vmem:[#allocation9 + $0x40] sm:$0xf]
          %v1714 = vld [vmem:[#allocation9 + $0x44] sm:$0xf]
          %v1715 = vld [vmem:[#allocation9 + $0x48] sm:$0xf]
          %v1716 = vld [vmem:[#allocation9 + $0x4c] sm:$0xf]
          %v1717 = vld [vmem:[#allocation9 + $0x50] sm:$0xf]
          %v1718 = vld [vmem:[#allocation9 + $0x54] sm:$0xf]
          %v1719 = vld [vmem:[#allocation9 + $0x58] sm:$0xf]
          %v1720 = vld [vmem:[#allocation9 + $0x5c] sm:$0xf]
          %v1721 = vld [vmem:[#allocation9 + $0x60] sm:$0xf]
          %v1722 = vld [vmem:[#allocation9 + $0x64] sm:$0xf]
          %v1723 = vld [vmem:[#allocation9 + $0x68] sm:$0xf]
          %v1724 = vld [vmem:[#allocation9 + $0x6c] sm:$0xf]
          %v1725 = vld [vmem:[#allocation9 + $0x70] sm:$0xf]
          %v1726 = vld [vmem:[#allocation9 + $0x74] sm:$0xf]
          %v1727 = vld [vmem:[#allocation9 + $0x78] sm:$0xf]
          %v1728 = vld [vmem:[#allocation9 + $0x7c] sm:$0xf]
          %v1729 = vld [vmem:[#allocation9 + $0x80] sm:$0xf]
          %v1730 = vld [vmem:[#allocation9 + $0x84] sm:$0xf]
          %v1731 = vld [vmem:[#allocation9 + $0x88] sm:$0xf]
          %v1732 = vld [vmem:[#allocation9 + $0x8c] sm:$0xf]
          %v1733 = vld [vmem:[#allocation9 + $0x90] sm:$0xf]
          %v1734 = vld [vmem:[#allocation9 + $0x94] sm:$0xf]
          %v1735 = vld [vmem:[#allocation9 + $0x98] sm:$0xf]
          %v1736 = vld [vmem:[#allocation9 + $0x9c] sm:$0xf]
          %v1737 = vld [vmem:[#allocation9 + $0xa0] sm:$0xf]
          %v1738 = vld [vmem:[#allocation9 + $0xa4] sm:$0xf]
          %v1739 = vld [vmem:[#allocation9 + $0xa8] sm:$0xf]
          %v1740 = vld [vmem:[#allocation9 + $0xac] sm:$0xf]
          %v1741 = vld [vmem:[#allocation9 + $0xb0] sm:$0xf]
          %v1742 = vld [vmem:[#allocation9 + $0xb4] sm:$0xf]
          %v1743 = vld [vmem:[#allocation9 + $0xb8] sm:$0xf]
          %v1744 = vld [vmem:[#allocation9 + $0xbc] sm:$0xf]
          %v1793 = vunpack.c.l.b16 %v1697
          %v1794 = vunpack.c.l.b16 %v1698
          %v1795 = vunpack.c.l.b16 %v1699
          %v1796 = vunpack.c.l.b16 %v1700
          %v1797 = vunpack.c.l.b16 %v1701
          %v1798 = vunpack.c.l.b16 %v1702
          %v1799 = vunpack.c.l.b16 %v1703
          %v1800 = vunpack.c.l.b16 %v1704
          %v1801 = vunpack.c.l.b16 %v1705
          %v1802 = vunpack.c.l.b16 %v1706
          %v1803 = vunpack.c.l.b16 %v1707
          %v1804 = vunpack.c.l.b16 %v1708
          %v1805 = vunpack.c.l.b16 %v1709
          %v1806 = vunpack.c.l.b16 %v1710
          %v1807 = vunpack.c.l.b16 %v1711
          %v1808 = vunpack.c.l.b16 %v1712
          %v1809 = vunpack.c.l.b16 %v1713
          %v1810 = vunpack.c.l.b16 %v1714
          %v1811 = vunpack.c.l.b16 %v1715
          %v1812 = vunpack.c.l.b16 %v1716
          %v1813 = vunpack.c.l.b16 %v1717
          %v1814 = vunpack.c.l.b16 %v1718
          %v1815 = vunpack.c.l.b16 %v1719
          %v1816 = vunpack.c.l.b16 %v1720
          %v1817 = vunpack.c.l.b16 %v1721
          %v1818 = vunpack.c.l.b16 %v1722
          %v1819 = vunpack.c.l.b16 %v1723
          %v1820 = vunpack.c.l.b16 %v1724
          %v1821 = vunpack.c.l.b16 %v1725
          %v1822 = vunpack.c.l.b16 %v1726
          %v1823 = vunpack.c.l.b16 %v1727
          %v1824 = vunpack.c.l.b16 %v1728
          %v1825 = vunpack.c.l.b16 %v1729
          %v1826 = vunpack.c.l.b16 %v1730
          %v1827 = vunpack.c.l.b16 %v1731
          %v1828 = vunpack.c.l.b16 %v1732
          %v1829 = vunpack.c.l.b16 %v1733
          %v1830 = vunpack.c.l.b16 %v1734
          %v1831 = vunpack.c.l.b16 %v1735
          %v1832 = vunpack.c.l.b16 %v1736
          %v1833 = vunpack.c.l.b16 %v1737
          %v1834 = vunpack.c.l.b16 %v1738
          %v1835 = vunpack.c.l.b16 %v1739
          %v1836 = vunpack.c.l.b16 %v1740
          %v1837 = vunpack.c.l.b16 %v1741
          %v1838 = vunpack.c.l.b16 %v1742
          %v1839 = vunpack.c.l.b16 %v1743
          %v1840 = vunpack.c.l.b16 %v1744
          %v1841 = vpack.c.b16 %v1794, %v1793
          %v1842 = vpack.c.b16 %v1796, %v1795
          %v1843 = vpack.c.b16 %v1798, %v1797
          %v1844 = vpack.c.b16 %v1800, %v1799
          %v1845 = vpack.c.b16 %v1802, %v1801
          %v1846 = vpack.c.b16 %v1804, %v1803
          %v1847 = vpack.c.b16 %v1806, %v1805
          %v1848 = vpack.c.b16 %v1808, %v1807
          %v1849 = vpack.c.b16 %v1810, %v1809
          %v1850 = vpack.c.b16 %v1812, %v1811
          %v1851 = vpack.c.b16 %v1814, %v1813
          %v1852 = vpack.c.b16 %v1816, %v1815
          %v1853 = vpack.c.b16 %v1818, %v1817
          %v1854 = vpack.c.b16 %v1820, %v1819
          %v1855 = vpack.c.b16 %v1822, %v1821
          %v1856 = vpack.c.b16 %v1824, %v1823
          %v1857 = vpack.c.b16 %v1826, %v1825
          %v1858 = vpack.c.b16 %v1828, %v1827
          %v1859 = vpack.c.b16 %v1830, %v1829
          %v1860 = vpack.c.b16 %v1832, %v1831
          %v1861 = vpack.c.b16 %v1834, %v1833
          %v1862 = vpack.c.b16 %v1836, %v1835
          %v1863 = vpack.c.b16 %v1838, %v1837
          %v1864 = vpack.c.b16 %v1840, %v1839
          %1889 = vmatprep.subr.bf16.mxu0 0
          %1890 = vmatpush1.bf16.msra.mxu0 %v1848
          %1891 = vmatprep.subr.bf16.mxu0 0
          %1892 = vmatpush1.bf16.msra.mxu0 %v1847
          %1893 = vmatprep.subr.bf16.mxu0 0
          %1894 = vmatpush1.bf16.msra.mxu0 %v1846
          %1895 = vmatprep.subr.bf16.mxu0 0
          %1896 = vmatpush1.bf16.msra.mxu0 %v1845
          %1897 = vmatprep.subr.bf16.mxu0 0
          %1898 = vmatpush1.bf16.msra.mxu0 %v1844
          %1899 = vmatprep.subr.bf16.mxu0 0
          %1900 = vmatpush1.bf16.msra.mxu0 %v1843
          %1901 = vmatprep.subr.bf16.mxu0 0
          %1902 = vmatpush1.bf16.msra.mxu0 %v1842
          %1903 = vmatprep.subr.bf16.mxu0 0
          %1904 = vmatpush1.bf16.msra.mxu0 %v1841
          %1905 = vmatprep.subr.bf16.mxu0 0
          %1906 = vmatpush2.bf16.msra.mxu0 %v1856
          %1907 = vmatprep.subr.bf16.mxu0 0
          %1908 = vmatpush2.bf16.msra.mxu0 %v1855
          %1909 = vmatprep.subr.bf16.mxu0 0
          %1910 = vmatpush2.bf16.msra.mxu0 %v1854
          %1911 = vmatprep.subr.bf16.mxu0 0
          %1912 = vmatpush2.bf16.msra.mxu0 %v1853
          %1913 = vmatprep.subr.bf16.mxu0 0
          %1914 = vmatpush2.bf16.msra.mxu0 %v1852
          %1915 = vmatprep.subr.bf16.mxu0 0
          %1916 = vmatpush2.bf16.msra.mxu0 %v1851
          %1917 = vmatprep.subr.bf16.mxu0 0
          %1918 = vmatpush2.bf16.msra.mxu0 %v1850
          %1919 = vmatprep.subr.bf16.mxu0 0
          %1920 = vmatpush2.bf16.msra.mxu0 %v1849
          %1921 = vmatprep.mubr.bf16.mxu0 %v1647
          %1922 = vmatmul.mubr.bf16.gmra.mxu0 %v1646
          %v1923 = vpop.f32.mrf.mxu0
          %v1924 = vadd.f32 0.0, %v1923
          %v1925 = vpop.f32.mrf.mxu0
          %v1926 = vpop.f32.mrf.mxu0
          %v1927 = vpop.f32.mrf.mxu0
          %1928 = vdwg.mxu0
          %1929 = vmatprep.subr.bf16.mxu0 0
          %1930 = vmatpush1.bf16.msra.mxu0 %v1864
          %1931 = vmatprep.subr.bf16.mxu0 0
          %1932 = vmatpush1.bf16.msra.mxu0 %v1863
          %1933 = vmatprep.subr.bf16.mxu0 0
          %1934 = vmatpush1.bf16.msra.mxu0 %v1862
          %1935 = vmatprep.subr.bf16.mxu0 0
          %1936 = vmatpush1.bf16.msra.mxu0 %v1861
          %1937 = vmatprep.subr.bf16.mxu0 0
          %1938 = vmatpush1.bf16.msra.mxu0 %v1860
          %1939 = vmatprep.subr.bf16.mxu0 0
          %1940 = vmatpush1.bf16.msra.mxu0 %v1859
          %1941 = vmatprep.subr.bf16.mxu0 0
          %1942 = vmatpush1.bf16.msra.mxu0 %v1858
          %1943 = vmatprep.subr.bf16.mxu0 0
          %1944 = vmatpush1.bf16.msra.mxu0 %v1857
          %1945 = vmatprep.subr.bf16.mxu0 0
          %1946 = vmatpush2.bf16.msra.mxu0 0
          %1947 = vmatprep.subr.bf16.mxu0 0
          %1948 = vmatpush2.bf16.msra.mxu0 0
          %1949 = vmatprep.subr.bf16.mxu0 0
          %1950 = vmatpush2.bf16.msra.mxu0 0
          %1951 = vmatprep.subr.bf16.mxu0 0
          %1952 = vmatpush2.bf16.msra.mxu0 0
          %1953 = vmatprep.subr.bf16.mxu0 0
          %1954 = vmatpush2.bf16.msra.mxu0 0
          %1955 = vmatprep.subr.bf16.mxu0 0
          %1956 = vmatpush2.bf16.msra.mxu0 0
          %1957 = vmatprep.subr.bf16.mxu0 0
          %1958 = vmatpush2.bf16.msra.mxu0 0
          %1959 = vmatprep.subr.bf16.mxu0 0
          %1960 = vmatpush2.bf16.msra.mxu0 0
          %1961 = vmatprep.mubr.bf16.mxu0 0
          %1962 = vmatmul.mubr.bf16.gmra.mxu0 %v1648
          %v1963 = vpop.f32.mrf.mxu0
          %v1964 = vadd.f32 %v1924, %v1963
          %v1965 = vpop.f32.mrf.mxu0
          %v1966 = vpop.f32.mrf.mxu0
          %v1967 = vpop.f32.mrf.mxu0
          %1968 = vdwg.mxu0
          %v2017 = vunpack.c.l.b16 %v1649
          %v2018 = vunpack.c.l.b16 %v1650
          %v2019 = vunpack.c.l.b16 %v1651
          %v2020 = vunpack.c.l.b16 %v1652
          %v2021 = vunpack.c.l.b16 %v1653
          %v2022 = vunpack.c.l.b16 %v1654
          %v2023 = vunpack.c.l.b16 %v1655
          %v2024 = vunpack.c.l.b16 %v1656
          %v2025 = vunpack.c.l.b16 %v1657
          %v2026 = vunpack.c.l.b16 %v1658
          %v2027 = vunpack.c.l.b16 %v1659
          %v2028 = vunpack.c.l.b16 %v1660
          %v2029 = vunpack.c.l.b16 %v1661
          %v2030 = vunpack.c.l.b16 %v1662
          %v2031 = vunpack.c.l.b16 %v1663
          %v2032 = vunpack.c.l.b16 %v1664
          %v2033 = vunpack.c.l.b16 %v1665
          %v2034 = vunpack.c.l.b16 %v1666
          %v2035 = vunpack.c.l.b16 %v1667
          %v2036 = vunpack.c.l.b16 %v1668
          %v2037 = vunpack.c.l.b16 %v1669
          %v2038 = vunpack.c.l.b16 %v1670
          %v2039 = vunpack.c.l.b16 %v1671
          %v2040 = vunpack.c.l.b16 %v1672
          %v2041 = vunpack.c.l.b16 %v1673
          %v2042 = vunpack.c.l.b16 %v1674
          %v2043 = vunpack.c.l.b16 %v1675
          %v2044 = vunpack.c.l.b16 %v1676
          %v2045 = vunpack.c.l.b16 %v1677
          %v2046 = vunpack.c.l.b16 %v1678
          %v2047 = vunpack.c.l.b16 %v1679
          %v2048 = vunpack.c.l.b16 %v1680
          %v2049 = vunpack.c.l.b16 %v1681
          %v2050 = vunpack.c.l.b16 %v1682
          %v2051 = vunpack.c.l.b16 %v1683
          %v2052 = vunpack.c.l.b16 %v1684
          %v2053 = vunpack.c.l.b16 %v1685
          %v2054 = vunpack.c.l.b16 %v1686
          %v2055 = vunpack.c.l.b16 %v1687
          %v2056 = vunpack.c.l.b16 %v1688
          %v2057 = vunpack.c.l.b16 %v1689
          %v2058 = vunpack.c.l.b16 %v1690
          %v2059 = vunpack.c.l.b16 %v1691
          %v2060 = vunpack.c.l.b16 %v1692
          %v2061 = vunpack.c.l.b16 %v1693
          %v2062 = vunpack.c.l.b16 %v1694
          %v2063 = vunpack.c.l.b16 %v1695
          %v2064 = vunpack.c.l.b16 %v1696
          %v2065 = vpack.c.b16 %v2018, %v2017
          %v2066 = vpack.c.b16 %v2020, %v2019
          %v2067 = vpack.c.b16 %v2022, %v2021
          %v2068 = vpack.c.b16 %v2024, %v2023
          %v2069 = vpack.c.b16 %v2026, %v2025
          %v2070 = vpack.c.b16 %v2028, %v2027
          %v2071 = vpack.c.b16 %v2030, %v2029
          %v2072 = vpack.c.b16 %v2032, %v2031
          %v2073 = vpack.c.b16 %v2034, %v2033
          %v2074 = vpack.c.b16 %v2036, %v2035
          %v2075 = vpack.c.b16 %v2038, %v2037
          %v2076 = vpack.c.b16 %v2040, %v2039
          %v2077 = vpack.c.b16 %v2042, %v2041
          %v2078 = vpack.c.b16 %v2044, %v2043
          %v2079 = vpack.c.b16 %v2046, %v2045
          %v2080 = vpack.c.b16 %v2048, %v2047
          %v2081 = vpack.c.b16 %v2050, %v2049
          %v2082 = vpack.c.b16 %v2052, %v2051
          %v2083 = vpack.c.b16 %v2054, %v2053
          %v2084 = vpack.c.b16 %v2056, %v2055
          %v2085 = vpack.c.b16 %v2058, %v2057
          %v2086 = vpack.c.b16 %v2060, %v2059
          %v2087 = vpack.c.b16 %v2062, %v2061
          %v2088 = vpack.c.b16 %v2064, %v2063
          %2113 = vmatprep.subr.bf16.mxu0 0
          %2114 = vmatpush1.bf16.msra.mxu0 %v2072
          %2115 = vmatprep.subr.bf16.mxu0 0
          %2116 = vmatpush1.bf16.msra.mxu0 %v2071
          %2117 = vmatprep.subr.bf16.mxu0 0
          %2118 = vmatpush1.bf16.msra.mxu0 %v2070
          %2119 = vmatprep.subr.bf16.mxu0 0
          %2120 = vmatpush1.bf16.msra.mxu0 %v2069
          %2121 = vmatprep.subr.bf16.mxu0 0
          %2122 = vmatpush1.bf16.msra.mxu0 %v2068
          %2123 = vmatprep.subr.bf16.mxu0 0
          %2124 = vmatpush1.bf16.msra.mxu0 %v2067
          %2125 = vmatprep.subr.bf16.mxu0 0
          %2126 = vmatpush1.bf16.msra.mxu0 %v2066
          %2127 = vmatprep.subr.bf16.mxu0 0
          %2128 = vmatpush1.bf16.msra.mxu0 %v2065
          %2129 = vmatprep.subr.bf16.mxu0 0
          %2130 = vmatpush2.bf16.msra.mxu0 %v2080
          %2131 = vmatprep.subr.bf16.mxu0 0
          %2132 = vmatpush2.bf16.msra.mxu0 %v2079
          %2133 = vmatprep.subr.bf16.mxu0 0
          %2134 = vmatpush2.bf16.msra.mxu0 %v2078
          %2135 = vmatprep.subr.bf16.mxu0 0
          %2136 = vmatpush2.bf16.msra.mxu0 %v2077
          %2137 = vmatprep.subr.bf16.mxu0 0
          %2138 = vmatpush2.bf16.msra.mxu0 %v2076
          %2139 = vmatprep.subr.bf16.mxu0 0
          %2140 = vmatpush2.bf16.msra.mxu0 %v2075
          %2141 = vmatprep.subr.bf16.mxu0 0
          %2142 = vmatpush2.bf16.msra.mxu0 %v2074
          %2143 = vmatprep.subr.bf16.mxu0 0
          %2144 = vmatpush2.bf16.msra.mxu0 %v2073
          %2145 = vmatprep.mubr.bf16.mxu0 %v1622
          %2146 = vmatmul.mubr.bf16.gmra.mxu0 %v1621
          %v2147 = vpop.f32.mrf.mxu0
          %v2148 = vadd.f32 %v1964, %v2147
          %v2149 = vpop.f32.mrf.mxu0
          %v2150 = vpop.f32.mrf.mxu0
          %v2151 = vpop.f32.mrf.mxu0
          %2152 = vdwg.mxu0
          %2153 = vmatprep.subr.bf16.mxu0 0
          %2154 = vmatpush1.bf16.msra.mxu0 %v2088
          %2155 = vmatprep.subr.bf16.mxu0 0
          %2156 = vmatpush1.bf16.msra.mxu0 %v2087
          %2157 = vmatprep.subr.bf16.mxu0 0
          %2158 = vmatpush1.bf16.msra.mxu0 %v2086
          %2159 = vmatprep.subr.bf16.mxu0 0
          %2160 = vmatpush1.bf16.msra.mxu0 %v2085
          %2161 = vmatprep.subr.bf16.mxu0 0
          %2162 = vmatpush1.bf16.msra.mxu0 %v2084
          %2163 = vmatprep.subr.bf16.mxu0 0
          %2164 = vmatpush1.bf16.msra.mxu0 %v2083
          %2165 = vmatprep.subr.bf16.mxu0 0
          %2166 = vmatpush1.bf16.msra.mxu0 %v2082
          %2167 = vmatprep.subr.bf16.mxu0 0
          %2168 = vmatpush1.bf16.msra.mxu0 %v2081
          %2169 = vmatprep.subr.bf16.mxu0 0
          %2170 = vmatpush2.bf16.msra.mxu0 0
          %2171 = vmatprep.subr.bf16.mxu0 0
          %2172 = vmatpush2.bf16.msra.mxu0 0
          %2173 = vmatprep.subr.bf16.mxu0 0
          %2174 = vmatpush2.bf16.msra.mxu0 0
          %2175 = vmatprep.subr.bf16.mxu0 0
          %2176 = vmatpush2.bf16.msra.mxu0 0
          %2177 = vmatprep.subr.bf16.mxu0 0
          %2178 = vmatpush2.bf16.msra.mxu0 0
          %2179 = vmatprep.subr.bf16.mxu0 0
          %2180 = vmatpush2.bf16.msra.mxu0 0
          %2181 = vmatprep.subr.bf16.mxu0 0
          %2182 = vmatpush2.bf16.msra.mxu0 0
          %2183 = vmatprep.subr.bf16.mxu0 0
          %2184 = vmatpush2.bf16.msra.mxu0 0
          %2185 = vmatprep.mubr.bf16.mxu0 0
          %2186 = vmatmul.mubr.bf16.gmra.mxu0 %v1623
          %v2187 = vpop.f32.mrf.mxu0
          %v2188 = vadd.f32 %v2148, %v2187
          %v2189 = vpop.f32.mrf.mxu0
          %v2190 = vpop.f32.mrf.mxu0
          %v2191 = vpop.f32.mrf.mxu0
          %2192 = vdwg.mxu0
          %v2193 = vld [vmem:[%s4] sm:$0x7]
          %v2194 = vlaneseq
          %v2195 = vshrl.u32 %v2194, 7
          %v2196 = vsub.s32 0, %v2195
          %v2197 = vrot.slane %v2193, %v2196
          %v2198 = vadd.f32 %v2188, %v2197
          %vm2199 = vcmask 1041408
          %v2200 = vsel %vm2199, %v2198, 0.0
          %2201 = vadd.xlane.f32.xlu0 %v2200
          %v2202 = vpop.xlane.xlu0 %2201
          %v2203 = vmul.f32 %v2202, 0.03125
          %v2204 = vmul.f32 %v2198, %v2198
          %v2205 = vsel %vm2199, %v2204, 0.0
          %2206 = vadd.xlane.f32.xlu0 %v2205
          %v2207 = vpop.xlane.xlu0 %2206
          %v2208 = vmul.f32 %v2207, 0.03125
          %v2209 = vmul.f32 %v2203, %v2203
          %v2210 = vsub.f32 %v2208, %v2209
          %v2211 = vmax.f32 %v2210, 0.0
          %v2212 = vsub.f32 %v2198, %v2203
          %v2213 = vadd.f32 %v2211, 1e-05
          %v2214 = vrsqrt.pop %v2213
          %v2215 = vmul.f32 %v2212, %v2214
          %v2216 = vlaneseq
          %v2217 = vshrl.u32 %v2216, 7
          %v2218 = vsub.s32 1, %v2217
          %v2219 = vrot.slane %v2193, %v2218
          %v2220 = vmul.f32 %v2215, %v2219
          %v2221 = vlaneseq
          %v2222 = vshrl.u32 %v2221, 7
          %v2223 = vsub.s32 2, %v2222
          %v2224 = vrot.slane %v2193, %v2223
          %v2225 = vadd.f32 %v2220, %v2224
          %v2226 = vtanh.pop %v2225
          %2227 = vst [vmem:[#allocation11] sm:$0x3] %v2226
        $region64: #{tpu_custom_call.1} parent=39 // pred_fallthru
          _
        // Predicated region
        $region65: #{tpu_custom_call.1} parent=39 // pred_check
          %p2228 = pneg %p178
        $region66: #{tpu_custom_call.1} parent=39 // pred_check_branch
          %2230 = sbr.rel (%p2228) target = $region68
        $region67: #{tpu_custom_call.1} parent=39 // pred_region
          %s2232 = ssub.s32 32, 32
          %2233 = vsyncadd [#allocation5], %s2232
          %s2234 = smul.addr %s27, 32
          %s2235 = scalar_lea.hbm %s5, %s2234
          %s2237 = sshll.u32 [#allocation11], 4
          %s2238 = int_to_ptr.vmem [resolvable:$true] %s2237
          %2240 = dma.vmem_to_hbm [thread:$0]  %s2238, 32, %s2235, [#allocation5]
        $region68: #{tpu_custom_call.1} parent=39 // pred_fallthru
          _
        // Predicated region
        $region69: #{tpu_custom_call.1} parent=39 // pred_check
          %p2241 = pneg %p178
        $region70: #{tpu_custom_call.1} parent=39 // pred_check_branch
          %2243 = sbr.rel (%p2241) target = $region72
        $region71: #{tpu_custom_call.1} parent=39 // pred_region
          %2244 = dma.done [#allocation5], 32
        $region72: #{tpu_custom_call.1} parent=39 // pred_fallthru
          _
      $region40: #{tpu_custom_call.1} parent=5 // pred_fallthru
        _
      %p2245 = scmp.le.s32.totalorder 2, %s17
      // Predicated region
      $region73: #{tpu_custom_call.1} parent=5 // pred_check
        %p2246 = pneg %p2245
      $region74: #{tpu_custom_call.1} parent=5 // pred_check_branch
        %2248 = sbr.rel (%p2246) target = $region76
      $region75: #{tpu_custom_call.1} parent=5 // pred_region
        %s2249 = ssub.s32 %s17, 2
      $region76: #{tpu_custom_call.1} parent=5 // pred_fallthru
        _
    $region6: #{tpu_custom_call.1} parent=1 // loop_footer
      %s21 = sadd.s32 1, %s17
    $region7: #{tpu_custom_call.1} parent=1 // loop_footer_branch
      %16 = sbr.rel target = $region3
    $region8: #{tpu_custom_call.1} parent=1 // loop_exit
      _
    %2250 = vsyncpa [#allocation4], 1
    %s2251 = scalar_lea.sflag [#allocation4], 1
    %2252 = vsyncpa %s2251, 1
    %2253 = vsyncpa [#allocation7], 1
    %2254 = vsyncpa [#allocation10], 1
    %2255 = vsyncpa [#allocation5], 1
    %s2256 = scalar_lea.sflag [#allocation5], 1
    %2257 = vsyncpa %s2256, 1

</llo_original>
